<compile_context>
chip_gen: v7x
topology: tpu7x:2x2x1
jax: 0.10.0
libtpu: 0.0.40
codegen_flags: <defaults>
</compile_context>

<pallas_src>
import time
import functools

import jax
import jax.numpy as jnp
from jax import lax
from jax.experimental import pallas as pl
from jax.experimental.pallas import tpu as pltpu


def _tpu_generation():
    """Best-effort TPU generation (5/6/7/...) for tile / VMEM-budget choices."""
    try:
        kind = jax.devices()[0].device_kind.lower()
    except Exception:
        return 6
    for g in (7, 6, 5, 4, 3, 2):
        if "v%d" % g in kind:
            return g
    return 6


def _conloss_kernel(fa_ref, ft_ref, aas_ref, bbs_ref, cidx_ref, cmod_ref,
                    k_ref, possum_ref, rowsum_ref,
                    pos_acc, row_acc,
                    *, num_smp, scale2, use_bf16_exp):
    """One (TM, TN) tile of the Gaussian kernel K plus the partial masked row
    reductions (positive-pair sum and the non-self softmax denominator),
    accumulated in VMEM scratch across the column grid axis."""
    i = pl.program_id(0)
    j = pl.program_id(1)
    tm = fa_ref.shape[0]
    tn = ft_ref.shape[1]

    @pl.when(j == 0)
    def _():
        pos_acc[...] = jnp.zeros_like(pos_acc)
        row_acc[...] = jnp.zeros_like(row_acc)

    # EuDist2 with the -1/(2 t^2) scale folded into the precomputed norms:
    #   K_rc = exp(-(||a_r||^2 + ||b_c||^2 - 2 a_r.b_c) / (2 t^2))
    #        = exp(scale2 * (a_r . b_c) + aas_r + bbs_c)
    # ft is the lane-dense (D, TN) column slab -> plain MXU A@B, no transpose.
    ab = lax.dot_general(fa_ref[...], ft_ref[...], (((1,), (0,)), ((), ())),
                         preferred_element_type=jnp.float32)        # (TM, TN)
    k = jnp.exp(ab * scale2 + aas_ref[...] + bbs_ref[...])
    k_ref[...] = k

    # Positive-pair mask (same sample id).  Self columns are included here and
    # removed in the diagonal-overlap branch below.
    row_idx = i * tm + lax.broadcasted_iota(jnp.int32, (tm, 1), 0)
    is_pos = cmod_ref[...] == (row_idx % num_smp)                    # (TM, TN)
    pos_part = jnp.sum(jnp.where(is_pos, k, 0.0), axis=1, keepdims=True)

    if use_bf16_exp:
        # Optional bf16 EUP exp (v6e/v7x): ~2x exp throughput but ~0.4% rel
        # error in the softmax denominator; off by default to match reference.
        exp_k = jnp.exp(k.astype(jnp.bfloat16)).astype(jnp.float32)
    else:
        exp_k = jnp.exp(k)
    row_part = jnp.sum(exp_k, axis=1, keepdims=True)

    # Self-column (diagonal-of-K) correction: only column blocks whose range
    # intersects this row block's range can contain r == c, so the extra
    # compare/select/reduce VPU work is confined to the block-diagonal window.
    col_lo = j * tn
    touches_diag = jnp.logical_and(col_lo < i * tm + tm, i * tm < col_lo + tn)

    @pl.when(touches_diag)
    def _():
        is_self = cidx_ref[...] == row_idx                           # (TM, TN)
        k_self = jnp.sum(jnp.where(is_self, k, 0.0), axis=1, keepdims=True)
        e_self = jnp.sum(jnp.where(is_self, exp_k, 0.0), axis=1, keepdims=True)
        pos_acc[...] += pos_part - k_self
        row_acc[...] += row_part - e_self

    @pl.when(jnp.logical_not(touches_diag))
    def _():
        pos_acc[...] += pos_part
        row_acc[...] += row_part

    @pl.when(j == pl.num_programs(1) - 1)
    def _():
        # TODO(synk): a lane-dense (1, TM) layout for these two outputs would
        # avoid masked partial stores, but needs a (TM,1)->(1,TM) relayout;
        # these stores are ~1 KiB per row block so they are kept column-shaped.
        possum_ref[...] = pos_acc[...]
        rowsum_ref[...] = row_acc[...]


def _vmem_bytes(tm, tn, dfeat):
    """Per-step VMEM working set including in-kernel f32 temporaries."""
    return (2 * tm * dfeat * 4        # fa row block (double buffered)
            + 2 * dfeat * tn * 4      # (D, TN) feature column slab
            + 2 * 3 * tn * 4          # bb_scaled / col_idx / col_mod slabs
            + 2 * tm * 4              # aa_scaled row block
            + 2 * tm * tn * 4         # K output block (double buffered)
            + 4 * 2 * tm * 4          # possum/rowsum blocks + accumulators
            + 5 * tm * tn * 4)        # ab / k / exp_k / mask-select temporaries


def _pick_tiles(n, dfeat, gen):
    """Generation-aware (TM, TN): big blocks on 128 MiB parts (v5e/v6e),
    conservative on v7x (64 MiB per TC); always divisors of N."""
    if gen >= 7:
        tm_max, tn_max, budget = 256, 2048, 44 << 20
    else:
        tm_max, tn_max, budget = 512, 4096, 96 << 20
    tm = min(tm_max, n)
    while tm > 8 and n % tm:
        tm //= 2
    tn = min(tn_max, n)
    while tn > 128 and n % tn:
        tn //= 2
    while tn > 128 and _vmem_bytes(tm, tn, dfeat) > budget:
        tn //= 2
    while tm > 8 and _vmem_bytes(tm, tn, dfeat) > budget:
        tm //= 2
    return tm, tn


def gaussian_kernel_and_stats(features, num_smp, t, tm=None, tn=None,
                              use_bf16_exp=False):
    """Dense Gaussian kernel K plus the two fused masked row reductions the
    contrastive loss needs:
      pos_sum_i = sum_{j ~ i, j != i} K_ij,   row_sum_i = sum_{j != i} exp(K_ij)."""
    n, dfeat = features.shape
    features = features.astype(jnp.float32)
    gen = _tpu_generation()
    if tm is None or tn is None:
        ptm, ptn = _pick_tiles(n, dfeat, gen)
        tm = tm or ptm
        tn = tn or ptn
    assert n % tm == 0 and n % tn == 0, (
        f"N={n} must be divisible by tile sizes tm={tm}, tn={tn}")
    # TODO(synk): ragged N (not divisible by the tile) would need padding plus
    # masking of the padded rows/cols in the reductions.

    inv_2t2 = 1.0 / (2.0 * float(t) * float(t))
    # One-time hoists: transposed features (lane-dense column operand), scaled
    # squared norms (the -1/(2t^2) factor pre-folded), column index / sample id.
    features_t = features.T                                      # (D, N)
    sq_scaled = jnp.sum(features * features, axis=1) * (-inv_2t2)
    aa_scaled = sq_scaled.reshape(n, 1)
    bb_scaled = sq_scaled.reshape(1, n)
    col_idx = jnp.arange(n, dtype=jnp.int32).reshape(1, n)
    col_mod = col_idx % jnp.int32(num_smp)

    kern = functools.partial(
        _conloss_kernel, num_smp=int(num_smp),
        scale2=2.0 * inv_2t2, use_bf16_exp=bool(use_bf16_exp))

    footprint = _vmem_bytes(tm, tn, dfeat)
    cap = (56 << 20) if gen >= 7 else (100 << 20)   # headroom under physical
    vmem_limit = int(min(max(footprint + (8 << 20), 32 << 20), cap))

    cost = pl.CostEstimate(
        flops=2 * n * n * dfeat + 10 * n * n,
        transcendentals=2 * n * n,
        bytes_accessed=n * n * 4 + (n // tm + 1) * n * dfeat * 4 + 16 * n)

    # TODO(synk): on HBM-bound v5e/v6e a bfloat16 K output would ~halve the
    # dominant N^2 writeback (and emitting only the per-view diagonal blocks
    # would cut it by num_view x), but the full f32 K is part of the module's
    # return value so it is kept to preserve the reference semantics.
    K, pos_sum, row_sum = pl.pallas_call(
        kern,
        out_shape=(jax.ShapeDtypeStruct((n, n), jnp.float32),
                   jax.ShapeDtypeStruct((n, 1), jnp.float32),
                   jax.ShapeDtypeStruct((n, 1), jnp.float32)),
        grid_spec=pltpu.PrefetchScalarGridSpec(
            num_scalar_prefetch=0,
            grid=(n // tm, n // tn),
            in_specs=[pl.BlockSpec((tm, dfeat), lambda i, j: (i, 0)),
                      pl.BlockSpec((dfeat, tn), lambda i, j: (0, j)),
                      pl.BlockSpec((tm, 1), lambda i, j: (i, 0)),
                      pl.BlockSpec((1, tn), lambda i, j: (0, j)),
                      pl.BlockSpec((1, tn), lambda i, j: (0, j)),
                      pl.BlockSpec((1, tn), lambda i, j: (0, j))],
            out_specs=[pl.BlockSpec((tm, tn), lambda i, j: (i, j)),
                       pl.BlockSpec((tm, 1), lambda i, j: (i, 0)),
                       pl.BlockSpec((tm, 1), lambda i, j: (i, 0))],
            scratch_shapes=[pltpu.VMEM((tm, 1), jnp.float32),
                            pltpu.VMEM((tm, 1), jnp.float32)]),
        compiler_params=pltpu.CompilerParams(
            dimension_semantics=("parallel", "arbitrary"),
            vmem_limit_bytes=vmem_limit),
        cost_estimate=cost,
    )(features, features_t, aa_scaled, bb_scaled, col_idx, col_mod)
    return K, pos_sum, row_sum


def con_loss_forward(features_list, kernel_options, temperature=1.0,
                     num_class=10):
    """JAX/Pallas port of ConLoss.forward (Gaussian kernel branch)."""
    num_view = len(features_list)
    num_smp = features_list[0].shape[0]
    features = jnp.concatenate(features_list, axis=0)            # (N, D)
    t = kernel_options['t']

    # Hot path in Pallas: K, non-self softmax denominators, positive-pair sums.
    K, pos_sum, row_sum = gaussian_kernel_and_stats(features, num_smp, t)

    # loss_con:
    #   log_prob_ij = K_ij - log(sum_{j'!=i} exp(K_ij'));  mask.sum(1) == V-1
    nv = num_view
    mean_log_prob_pos = -(pos_sum[:, 0]
                          - (nv - 1) * jnp.log(row_sum[:, 0])) / (nv - 1)
    loss_con = jnp.mean(mean_log_prob_pos)

    # kernel = mean over views of the per-view diagonal blocks of K.
    # Static slices (no fancy-index gather over the full (N, N) array).
    S = num_smp
    kernel_mat = sum(K[v * S:(v + 1) * S, v * S:(v + 1) * S]
                     for v in range(num_view)) / num_view

    # TODO(synk): torch.linalg.eig (general complex eig) has no TPU lowering;
    # kernel_mat is symmetric so eigh yields the same eigendecomposition (up
    # to eigenvector sign / ordering within degenerate eigenvalues).
    val, vec = jnp.linalg.eigh(kernel_mat)
    ind = jnp.argsort(-val)                                      # descending
    # Row indexing of the eigenvector matrix, matching the reference code.
    H = vec[ind[:num_class], :]
    loss_extra = (jnp.trace(kernel_mat)
                  - jnp.trace(H @ kernel_mat @ H.T)) / num_smp

    # F.normalize(H): L2-normalize rows with eps=1e-12
    Hn = H / jnp.maximum(jnp.linalg.norm(H, axis=1, keepdims=True), 1e-12)

    return loss_con, loss_extra, K, Hn, time.time()


if __name__ == "__main__":
    key = jax.random.PRNGKey(0)
    num_view, num_smp, dim = 2, 64, 32      # N = num_view * num_smp = 128
    keys = jax.random.split(key, num_view)
    features_list = [jax.random.normal(k, (num_smp, dim), dtype=jnp.float32)
                     for k in keys]
    kernel_options = {'type': 'Gaussian', 't': 1.0}

    loss_con, loss_extra, K, H, _ = con_loss_forward(
        features_list, kernel_options, temperature=1.0, num_class=10)
    jax.block_until_ready((loss_con, loss_extra, K, H))
    print("KERNEL_OK")
</pallas_src>

<mosaic_0001>
module attributes {stable_mosaic.version = 11 : i64} {
  func.func @_conloss_kernel(%arg0: i32, %arg1: i32, %arg2: memref<128x32xf32, #tpu.memory_space<vmem>>, %arg3: memref<32x128xf32, #tpu.memory_space<vmem>>, %arg4: memref<128x1xf32, #tpu.memory_space<vmem>>, %arg5: memref<1x128xf32, #tpu.memory_space<vmem>>, %arg6: memref<1x128xi32, #tpu.memory_space<vmem>>, %arg7: memref<1x128xi32, #tpu.memory_space<vmem>>, %arg8: memref<128x128xf32, #tpu.memory_space<vmem>>, %arg9: memref<128x1xf32, #tpu.memory_space<vmem>>, %arg10: memref<128x1xf32, #tpu.memory_space<vmem>>, %arg11: memref<128x1xf32, #tpu.memory_space<vmem>>, %arg12: memref<128x1xf32, #tpu.memory_space<vmem>>) attributes {dimension_semantics = [#tpu.dimension_semantics<parallel>, #tpu.dimension_semantics<arbitrary>], iteration_bounds = array<i64: 1, 1>, scalar_prefetch = 0 : i64, scratch_operands = 2 : i64, tpu.core_type = #tpu.core_type<tc>, window_params = [{transform_indices = @transform_0, window_bounds = array<i64: 128, 32>}, {transform_indices = @transform_1, window_bounds = array<i64: 32, 128>}, {transform_indices = @transform_2, window_bounds = array<i64: 128, 1>}, {transform_indices = @transform_3, window_bounds = array<i64: 1, 128>}, {transform_indices = @transform_4, window_bounds = array<i64: 1, 128>}, {transform_indices = @transform_5, window_bounds = array<i64: 1, 128>}, {transform_indices = @transform_6, window_bounds = array<i64: 128, 128>}, {transform_indices = @transform_7, window_bounds = array<i64: 128, 1>}, {transform_indices = @transform_8, window_bounds = array<i64: 128, 1>}]} {
    %c0_i32 = arith.constant 0 : i32
    %0 = arith.cmpi eq, %arg1, %c0_i32 : i32
    %1 = arith.extui %0 : i1 to i32
    %c0_i32_0 = arith.constant 0 : i32
    %2 = arith.cmpi ne, %1, %c0_i32_0 : i32
    scf.if %2 {
      %cst_29 = arith.constant 0.000000e+00 : f32
      %63 = vector.broadcast %cst_29 : f32 to vector<128x1xf32>
      %c0_30 = arith.constant 0 : index
      %c0_31 = arith.constant 0 : index
      %64 = vector.load %arg11[%c0_30, %c0_31] : memref<128x1xf32, #tpu.memory_space<vmem>>, vector<128x1xf32>
      tpu.vector_store %arg11[%c0_30, %c0_31], %63 {strides = array<i32>} : memref<128x1xf32, #tpu.memory_space<vmem>>, vector<128x1xf32>,
      %cst_32 = arith.constant 0.000000e+00 : f32
      %65 = vector.broadcast %cst_32 : f32 to vector<128x1xf32>
      %c0_33 = arith.constant 0 : index
      %c0_34 = arith.constant 0 : index
      %66 = vector.load %arg12[%c0_33, %c0_34] : memref<128x1xf32, #tpu.memory_space<vmem>>, vector<128x1xf32>
      tpu.vector_store %arg12[%c0_33, %c0_34], %65 {strides = array<i32>} : memref<128x1xf32, #tpu.memory_space<vmem>>, vector<128x1xf32>,
    } else {
    }
    %c0 = arith.constant 0 : index
    %c0_1 = arith.constant 0 : index
    %3 = vector.load %arg2[%c0, %c0_1] : memref<128x32xf32, #tpu.memory_space<vmem>>, vector<128x32xf32>
    %c0_2 = arith.constant 0 : index
    %c0_3 = arith.constant 0 : index
    %4 = vector.load %arg3[%c0_2, %c0_3] : memref<32x128xf32, #tpu.memory_space<vmem>>, vector<32x128xf32>
    %cst = arith.constant dense<0.000000e+00> : vector<128x128xf32>
    %5 = tpu.matmul %3, %4, %cst {dimension_numbers = #tpu.dot_dimension_numbers<[1], [0], [0], [1], [0, 0, 1, 1], [], []>} : vector<128x32xf32>, vector<32x128xf32>, vector<128x128xf32> -> vector<128x128xf32>
    %cst_4 = arith.constant 1.000000e+00 : f32
    %6 = vector.broadcast %cst_4 : f32 to vector<128x128xf32>
    %7 = arith.mulf %5, %6 : vector<128x128xf32>
    %c0_5 = arith.constant 0 : index
    %c0_6 = arith.constant 0 : index
    %8 = vector.load %arg4[%c0_5, %c0_6] : memref<128x1xf32, #tpu.memory_space<vmem>>, vector<128x1xf32>
    %9 = vector.broadcast %8 : vector<128x1xf32> to vector<128x128xf32>
    %10 = arith.addf %7, %9 : vector<128x128xf32>
    %c0_7 = arith.constant 0 : index
    %c0_8 = arith.constant 0 : index
    %11 = vector.load %arg5[%c0_7, %c0_8] : memref<1x128xf32, #tpu.memory_space<vmem>>, vector<1x128xf32>
    %12 = vector.broadcast %11 : vector<1x128xf32> to vector<128x128xf32>
    %13 = arith.addf %10, %12 : vector<128x128xf32>
    %14 = math.exp %13 : vector<128x128xf32>
    %c0_9 = arith.constant 0 : index
    %c0_10 = arith.constant 0 : index
    %15 = vector.load %arg8[%c0_9, %c0_10] : memref<128x128xf32, #tpu.memory_space<vmem>>, vector<128x128xf32>
    tpu.vector_store %arg8[%c0_9, %c0_10], %14 {strides = array<i32>} : memref<128x128xf32, #tpu.memory_space<vmem>>, vector<128x128xf32>,
    %c128_i32 = arith.constant 128 : i32
    %16 = arith.muli %arg0, %c128_i32 : i32
    %17 = tpu.iota {dimensions = array<i32: 0>} : vector<128x1xi32>
    %18 = vector.broadcast %16 : i32 to vector<128x1xi32>
    %19 = arith.addi %18, %17 : vector<128x1xi32>
    %c0_11 = arith.constant 0 : index
    %c0_12 = arith.constant 0 : index
    %20 = vector.load %arg7[%c0_11, %c0_12] : memref<1x128xi32, #tpu.memory_space<vmem>>, vector<1x128xi32>
    %c64_i32 = arith.constant 64 : i32
    %c0_i32_13 = arith.constant 0 : i32
    %21 = arith.cmpi eq, %c64_i32, %c0_i32_13 : i32
    %c1_i32 = arith.constant 1 : i32
    %22 = arith.select %21, %c1_i32, %c64_i32 : i32
    %23 = vector.broadcast %22 : i32 to vector<128x1xi32>
    %24 = arith.remsi %19, %23 : vector<128x1xi32>
    %c0_i32_14 = arith.constant 0 : i32
    %25 = vector.broadcast %c0_i32_14 : i32 to vector<128x1xi32>
    %26 = arith.cmpi ne, %24, %25 : vector<128x1xi32>
    %c0_i32_15 = arith.constant 0 : i32
    %27 = vector.broadcast %c0_i32_15 : i32 to vector<128x1xi32>
    %28 = arith.cmpi slt, %24, %27 : vector<128x1xi32>
    %c0_i32_16 = arith.constant 0 : i32
    %29 = arith.cmpi slt, %22, %c0_i32_16 : i32
    %30 = vector.broadcast %29 : i1 to vector<128x1xi1>
    %31 = vector.broadcast %30 : vector<128x1xi1> to vector<128x1xi1>
    %32 = arith.xori %28, %31 : vector<128x1xi1>
    %33 = arith.andi %32, %26 : vector<128x1xi1>
    %34 = vector.broadcast %22 : i32 to vector<128x1xi32>
    %35 = arith.addi %24, %34 : vector<128x1xi32>
    %36 = arith.select %33, %35, %24 : vector<128x1xi1>, vector<128x1xi32>
    %37 = vector.broadcast %20 : vector<1x128xi32> to vector<128x128xi32>
    %38 = vector.broadcast %36 : vector<128x1xi32> to vector<128x128xi32>
    %39 = arith.cmpi eq, %37, %38 : vector<128x128xi32>
    %cst_17 = arith.constant 0.000000e+00 : f32
    %40 = vector.broadcast %cst_17 : f32 to vector<128x128xf32>
    %41 = arith.select %39, %14, %40 : vector<128x128xi1>, vector<128x128xf32>
    %cst_18 = arith.constant dense<0.000000e+00> : vector<128xf32>
    %42 = vector.multi_reduction <add>, %41, %cst_18 [1] : vector<128x128xf32> to vector<128xf32>
    %43 = vector.shape_cast %42 : vector<128xf32> to vector<128x1xf32>
    %44 = math.exp %14 : vector<128x128xf32>
    %cst_19 = arith.constant dense<0.000000e+00> : vector<128xf32>
    %45 = vector.multi_reduction <add>, %44, %cst_19 [1] : vector<128x128xf32> to vector<128xf32>
    %46 = vector.shape_cast %45 : vector<128xf32> to vector<128x1xf32>
    %c128_i32_20 = arith.constant 128 : i32
    %47 = arith.muli %arg1, %c128_i32_20 : i32
    %c128_i32_21 = arith.constant 128 : i32
    %48 = arith.muli %arg0, %c128_i32_21 : i32
    %c128_i32_22 = arith.constant 128 : i32
    %49 = arith.addi %48, %c128_i32_22 : i32
    %50 = arith.cmpi slt, %47, %49 : i32
    %c128_i32_23 = arith.constant 128 : i32
    %51 = arith.muli %arg0, %c128_i32_23 : i32
    %c128_i32_24 = arith.constant 128 : i32
    %52 = arith.addi %47, %c128_i32_24 : i32
    %53 = arith.cmpi slt, %51, %52 : i32
    %54 = arith.andi %50, %53 : i1
    %55 = arith.extui %54 : i1 to i32
    %c0_i32_25 = arith.constant 0 : i32
    %56 = arith.cmpi ne, %55, %c0_i32_25 : i32
    scf.if %56 {
      %c0_29 = arith.constant 0 : index
      %c0_30 = arith.constant 0 : index
      %63 = vector.load %arg6[%c0_29, %c0_30] : memref<1x128xi32, #tpu.memory_space<vmem>>, vector<1x128xi32>
      %64 = vector.broadcast %63 : vector<1x128xi32> to vector<128x128xi32>
      %65 = vector.broadcast %19 : vector<128x1xi32> to vector<128x128xi32>
      %66 = arith.cmpi eq, %64, %65 : vector<128x128xi32>
      %cst_31 = arith.constant 0.000000e+00 : f32
      %67 = vector.broadcast %cst_31 : f32 to vector<128x128xf32>
      %68 = arith.select %66, %14, %67 : vector<128x128xi1>, vector<128x128xf32>
      %cst_32 = arith.constant dense<0.000000e+00> : vector<128xf32>
      %69 = vector.multi_reduction <add>, %68, %cst_32 [1] : vector<128x128xf32> to vector<128xf32>
      %70 = vector.shape_cast %69 : vector<128xf32> to vector<128x1xf32>
      %cst_33 = arith.constant 0.000000e+00 : f32
      %71 = vector.broadcast %cst_33 : f32 to vector<128x128xf32>
      %72 = arith.select %66, %44, %71 : vector<128x128xi1>, vector<128x128xf32>
      %cst_34 = arith.constant dense<0.000000e+00> : vector<128xf32>
      %73 = vector.multi_reduction <add>, %72, %cst_34 [1] : vector<128x128xf32> to vector<128xf32>
      %74 = vector.shape_cast %73 : vector<128xf32> to vector<128x1xf32>
      %c0_35 = arith.constant 0 : index
      %c0_36 = arith.constant 0 : index
      %75 = vector.load %arg11[%c0_35, %c0_36] : memref<128x1xf32, #tpu.memory_space<vmem>>, vector<128x1xf32>
      %76 = arith.subf %43, %70 : vector<128x1xf32>
      %77 = arith.addf %75, %76 : vector<128x1xf32>
      %c0_37 = arith.constant 0 : index
      %c0_38 = arith.constant 0 : index
      %78 = vector.load %arg11[%c0_37, %c0_38] : memref<128x1xf32, #tpu.memory_space<vmem>>, vector<128x1xf32>
      tpu.vector_store %arg11[%c0_37, %c0_38], %77 {strides = array<i32>} : memref<128x1xf32, #tpu.memory_space<vmem>>, vector<128x1xf32>,
      %c0_39 = arith.constant 0 : index
      %c0_40 = arith.constant 0 : index
      %79 = vector.load %arg12[%c0_39, %c0_40] : memref<128x1xf32, #tpu.memory_space<vmem>>, vector<128x1xf32>
      %80 = arith.subf %46, %74 : vector<128x1xf32>
      %81 = arith.addf %79, %80 : vector<128x1xf32>
      %c0_41 = arith.constant 0 : index
      %c0_42 = arith.constant 0 : index
      %82 = vector.load %arg12[%c0_41, %c0_42] : memref<128x1xf32, #tpu.memory_space<vmem>>, vector<128x1xf32>
      tpu.vector_store %arg12[%c0_41, %c0_42], %81 {strides = array<i32>} : memref<128x1xf32, #tpu.memory_space<vmem>>, vector<128x1xf32>,
    } else {
    }
    %true = arith.constant true
    %57 = arith.xori %54, %true : i1
    %58 = arith.extui %57 : i1 to i32
    %c0_i32_26 = arith.constant 0 : i32
    %59 = arith.cmpi ne, %58, %c0_i32_26 : i32
    scf.if %59 {
      %c0_29 = arith.constant 0 : index
      %c0_30 = arith.constant 0 : index
      %63 = vector.load %arg11[%c0_29, %c0_30] : memref<128x1xf32, #tpu.memory_space<vmem>>, vector<128x1xf32>
      %64 = arith.addf %63, %43 : vector<128x1xf32>
      %c0_31 = arith.constant 0 : index
      %c0_32 = arith.constant 0 : index
      %65 = vector.load %arg11[%c0_31, %c0_32] : memref<128x1xf32, #tpu.memory_space<vmem>>, vector<128x1xf32>
      tpu.vector_store %arg11[%c0_31, %c0_32], %64 {strides = array<i32>} : memref<128x1xf32, #tpu.memory_space<vmem>>, vector<128x1xf32>,
      %c0_33 = arith.constant 0 : index
      %c0_34 = arith.constant 0 : index
      %66 = vector.load %arg12[%c0_33, %c0_34] : memref<128x1xf32, #tpu.memory_space<vmem>>, vector<128x1xf32>
      %67 = arith.addf %66, %46 : vector<128x1xf32>
      %c0_35 = arith.constant 0 : index
      %c0_36 = arith.constant 0 : index
      %68 = vector.load %arg12[%c0_35, %c0_36] : memref<128x1xf32, #tpu.memory_space<vmem>>, vector<128x1xf32>
      tpu.vector_store %arg12[%c0_35, %c0_36], %67 {strides = array<i32>} : memref<128x1xf32, #tpu.memory_space<vmem>>, vector<128x1xf32>,
    } else {
    }
    %c0_i32_27 = arith.constant 0 : i32
    %60 = arith.cmpi eq, %arg1, %c0_i32_27 : i32
    %61 = arith.extui %60 : i1 to i32
    %c0_i32_28 = arith.constant 0 : i32
    %62 = arith.cmpi ne, %61, %c0_i32_28 : i32
    scf.if %62 {
      %c0_29 = arith.constant 0 : index
      %c0_30 = arith.constant 0 : index
      %63 = vector.load %arg11[%c0_29, %c0_30] : memref<128x1xf32, #tpu.memory_space<vmem>>, vector<128x1xf32>
      %c0_31 = arith.constant 0 : index
      %c0_32 = arith.constant 0 : index
      %64 = vector.load %arg9[%c0_31, %c0_32] : memref<128x1xf32, #tpu.memory_space<vmem>>, vector<128x1xf32>
      tpu.vector_store %arg9[%c0_31, %c0_32], %63 {strides = array<i32>} : memref<128x1xf32, #tpu.memory_space<vmem>>, vector<128x1xf32>,
      %c0_33 = arith.constant 0 : index
      %c0_34 = arith.constant 0 : index
      %65 = vector.load %arg12[%c0_33, %c0_34] : memref<128x1xf32, #tpu.memory_space<vmem>>, vector<128x1xf32>
      %c0_35 = arith.constant 0 : index
      %c0_36 = arith.constant 0 : index
      %66 = vector.load %arg10[%c0_35, %c0_36] : memref<128x1xf32, #tpu.memory_space<vmem>>, vector<128x1xf32>
      tpu.vector_store %arg10[%c0_35, %c0_36], %65 {strides = array<i32>} : memref<128x1xf32, #tpu.memory_space<vmem>>, vector<128x1xf32>,
    } else {
    }
    return
  }
  func.func @transform_0(%arg0: i32, %arg1: i32) -> (i32, i32) {
    %c0_i32 = arith.constant 0 : i32
    %c0_i32_0 = arith.constant 0 : i32
    return %arg0, %c0_i32 : i32, i32
  }
  func.func @transform_1(%arg0: i32, %arg1: i32) -> (i32, i32) {
    %c0_i32 = arith.constant 0 : i32
    %c0_i32_0 = arith.constant 0 : i32
    return %c0_i32, %arg1 : i32, i32
  }
  func.func @transform_2(%arg0: i32, %arg1: i32) -> (i32, i32) {
    %c0_i32 = arith.constant 0 : i32
    %c0_i32_0 = arith.constant 0 : i32
    return %arg0, %c0_i32 : i32, i32
  }
  func.func @transform_3(%arg0: i32, %arg1: i32) -> (i32, i32) {
    %c0_i32 = arith.constant 0 : i32
    %c0_i32_0 = arith.constant 0 : i32
    return %c0_i32, %arg1 : i32, i32
  }
  func.func @transform_4(%arg0: i32, %arg1: i32) -> (i32, i32) {
    %c0_i32 = arith.constant 0 : i32
    %c0_i32_0 = arith.constant 0 : i32
    return %c0_i32, %arg1 : i32, i32
  }
  func.func @transform_5(%arg0: i32, %arg1: i32) -> (i32, i32) {
    %c0_i32 = arith.constant 0 : i32
    %c0_i32_0 = arith.constant 0 : i32
    return %c0_i32, %arg1 : i32, i32
  }
  func.func @transform_6(%arg0: i32, %arg1: i32) -> (i32, i32) {
    %c0_i32 = arith.constant 0 : i32
    return %arg0, %arg1 : i32, i32
  }
  func.func @transform_7(%arg0: i32, %arg1: i32) -> (i32, i32) {
    %c0_i32 = arith.constant 0 : i32
    %c0_i32_0 = arith.constant 0 : i32
    return %arg0, %c0_i32 : i32, i32
  }
  func.func @transform_8(%arg0: i32, %arg1: i32) -> (i32, i32) {
    %c0_i32 = arith.constant 0 : i32
    %c0_i32_0 = arith.constant 0 : i32
    return %arg0, %c0_i32 : i32, i32
  }
}

</mosaic_0001>

<llo_original>
// kernel: tpu_custom_call.1
$region0: #{tpu_custom_call.1}
  #allocation0 [shape = 'u32[]', space=smem, size = 0x4, offset = 0x4, fixed_abs, tag = 'smem constant byte address 0x4 - core index']
  #allocation1 [shape = 'u32[144,128]{1,0:T(1,128)}', space=vmem, size = 0x12000, scoped, tag = 'internal scratch']
  #allocation2 [shape = 'f32[128,1]{1,0:T(8,128)}', space=vmem, size = 0x10000, scoped, tag = 'scratch operand']
  #allocation3 [shape = 'f32[128,1]{1,0:T(8,128)}', space=vmem, size = 0x10000, scoped, tag = 'scratch operand']
  %s0 = inlined_call_operand.vmem [shape: f32[128,32], index: 0, kind: input, shape index: {}]
  %s1 = inlined_call_operand.vmem [shape: f32[32,128], index: 1, kind: input, shape index: {}]
  %s2 = inlined_call_operand.vmem [shape: f32[128,1], index: 2, kind: input, shape index: {}]
  %s3 = inlined_call_operand.vmem [shape: f32[1,128], index: 3, kind: input, shape index: {}]
  %s4 = inlined_call_operand.vmem [shape: s32[1,128], index: 4, kind: input, shape index: {}]
  %s5 = inlined_call_operand.vmem [shape: s32[1,128], index: 5, kind: input, shape index: {}]
  %s6 = inlined_call_operand.hbm [shape: f32[128,128], index: 6, kind: output, shape index: {0}]
  %s7 = inlined_call_operand.vmem [shape: f32[128,1], index: 7, kind: output, shape index: {1}]
  %s8 = inlined_call_operand.vmem [shape: f32[128,1], index: 8, kind: output, shape index: {2}]
  %9 = xla_tuple %s6, %s7, %s8
  %s10 = sld [smem:[#allocation0]]
  $region66: #{tpu_custom_call.1} parent=0
    _
  %s12 = ssub.s32 1, %s10
  %s13 = scalar_select 0, %s12, %s10
  $region1: #{tpu_custom_call.1} parent=0
    #allocation4 [shape = 'u8[65536]{0}', space=vmem, size = 0x10000, scoped, tag = 'output window, operand 0, single buffered']
    #allocation5 [shape = 's32[1]{0}', space=sflag, size = 0x4, scoped, tag = 'scoped memory for tpu_custom_call.1']
    %14 = vsyncpa [#allocation5], 0
    // Predicated region
    $region2: #{tpu_custom_call.1} parent=1 // pred_check
      _
    $region3: #{tpu_custom_call.1} parent=1 // pred_check_branch
      %16 = sbr.rel (0) target = $region5
    $region4: #{tpu_custom_call.1} parent=1 // pred_region
      _
    $region5: #{tpu_custom_call.1} parent=1 // pred_fallthru
      _
    // Predicated region
    $region6: #{tpu_custom_call.1} parent=1 // pred_check
      _
    $region7: #{tpu_custom_call.1} parent=1 // pred_check_branch
      %18 = sbr.rel (0) target = $region9
    $region8: #{tpu_custom_call.1} parent=1 // pred_region
      _
    $region9: #{tpu_custom_call.1} parent=1 // pred_fallthru
      _
    // Predicated region
    $region10: #{tpu_custom_call.1} parent=1 // pred_check
      _
    $region11: #{tpu_custom_call.1} parent=1 // pred_check_branch
      %20 = sbr.rel (0) target = $region13
    $region12: #{tpu_custom_call.1} parent=1 // pred_region
      _
    $region13: #{tpu_custom_call.1} parent=1 // pred_fallthru
      _
    // Predicated region
    $region14: #{tpu_custom_call.1} parent=1 // pred_check
      _
    $region15: #{tpu_custom_call.1} parent=1 // pred_check_branch
      %22 = sbr.rel (0) target = $region17
    $region16: #{tpu_custom_call.1} parent=1 // pred_region
      _
    $region17: #{tpu_custom_call.1} parent=1 // pred_fallthru
      _
    // Predicated region
    $region18: #{tpu_custom_call.1} parent=1 // pred_check
      _
    $region19: #{tpu_custom_call.1} parent=1 // pred_check_branch
      %24 = sbr.rel (0) target = $region21
    $region20: #{tpu_custom_call.1} parent=1 // pred_region
      _
    $region21: #{tpu_custom_call.1} parent=1 // pred_fallthru
      _
    // Predicated region
    $region22: #{tpu_custom_call.1} parent=1 // pred_check
      _
    $region23: #{tpu_custom_call.1} parent=1 // pred_check_branch
      %26 = sbr.rel (0) target = $region25
    $region24: #{tpu_custom_call.1} parent=1 // pred_region
      _
    $region25: #{tpu_custom_call.1} parent=1 // pred_fallthru
      _
    %p27 = scmp.eq.s32.totalorder 0, 0
    // Predicated region
    $region26: #{tpu_custom_call.1} parent=1 // pred_check
      %p28 = pneg %p27
    $region27: #{tpu_custom_call.1} parent=1 // pred_check_branch
      %30 = sbr.rel (%p28) target = $region29
    $region28: #{tpu_custom_call.1} parent=1 // pred_region
      %vm31 = vcmask 7168
      %32 = vst.msk [vmem:[#allocation2] sm:$0xff] %vm31, 0.0
      %33 = vst.msk [vmem:[#allocation2 + $0x8] sm:$0xff] %vm31, 0.0
      %34 = vst.msk [vmem:[#allocation2 + $0x10] sm:$0xff] %vm31, 0.0
      %35 = vst.msk [vmem:[#allocation2 + $0x18] sm:$0xff] %vm31, 0.0
      %36 = vst.msk [vmem:[#allocation2 + $0x20] sm:$0xff] %vm31, 0.0
      %37 = vst.msk [vmem:[#allocation2 + $0x28] sm:$0xff] %vm31, 0.0
      %38 = vst.msk [vmem:[#allocation2 + $0x30] sm:$0xff] %vm31, 0.0
      %39 = vst.msk [vmem:[#allocation2 + $0x38] sm:$0xff] %vm31, 0.0
      %40 = vst.msk [vmem:[#allocation2 + $0x40] sm:$0xff] %vm31, 0.0
      %41 = vst.msk [vmem:[#allocation2 + $0x48] sm:$0xff] %vm31, 0.0
      %42 = vst.msk [vmem:[#allocation2 + $0x50] sm:$0xff] %vm31, 0.0
      %43 = vst.msk [vmem:[#allocation2 + $0x58] sm:$0xff] %vm31, 0.0
      %44 = vst.msk [vmem:[#allocation2 + $0x60] sm:$0xff] %vm31, 0.0
      %45 = vst.msk [vmem:[#allocation2 + $0x68] sm:$0xff] %vm31, 0.0
      %46 = vst.msk [vmem:[#allocation2 + $0x70] sm:$0xff] %vm31, 0.0
      %47 = vst.msk [vmem:[#allocation2 + $0x78] sm:$0xff] %vm31, 0.0
      %48 = vst.msk [vmem:[#allocation3] sm:$0xff] %vm31, 0.0
      %49 = vst.msk [vmem:[#allocation3 + $0x8] sm:$0xff] %vm31, 0.0
      %50 = vst.msk [vmem:[#allocation3 + $0x10] sm:$0xff] %vm31, 0.0
      %51 = vst.msk [vmem:[#allocation3 + $0x18] sm:$0xff] %vm31, 0.0
      %52 = vst.msk [vmem:[#allocation3 + $0x20] sm:$0xff] %vm31, 0.0
      %53 = vst.msk [vmem:[#allocation3 + $0x28] sm:$0xff] %vm31, 0.0
      %54 = vst.msk [vmem:[#allocation3 + $0x30] sm:$0xff] %vm31, 0.0
      %55 = vst.msk [vmem:[#allocation3 + $0x38] sm:$0xff] %vm31, 0.0
      %56 = vst.msk [vmem:[#allocation3 + $0x40] sm:$0xff] %vm31, 0.0
      %57 = vst.msk [vmem:[#allocation3 + $0x48] sm:$0xff] %vm31, 0.0
      %58 = vst.msk [vmem:[#allocation3 + $0x50] sm:$0xff] %vm31, 0.0
      %59 = vst.msk [vmem:[#allocation3 + $0x58] sm:$0xff] %vm31, 0.0
      %60 = vst.msk [vmem:[#allocation3 + $0x60] sm:$0xff] %vm31, 0.0
      %61 = vst.msk [vmem:[#allocation3 + $0x68] sm:$0xff] %vm31, 0.0
      %62 = vst.msk [vmem:[#allocation3 + $0x70] sm:$0xff] %vm31, 0.0
      %63 = vst.msk [vmem:[#allocation3 + $0x78] sm:$0xff] %vm31, 0.0
    $region29: #{tpu_custom_call.1} parent=1 // pred_fallthru
      _
    %v64 = vld [vmem:[%s0] sm:$0xff]
    %v65 = vld [vmem:[%s0 + $0x8] sm:$0xff]
    %v66 = vld [vmem:[%s0 + $0x10] sm:$0xff]
    %v67 = vld [vmem:[%s0 + $0x18] sm:$0xff]
    %v68 = vld [vmem:[%s0 + $0x20] sm:$0xff]
    %v69 = vld [vmem:[%s0 + $0x28] sm:$0xff]
    %v70 = vld [vmem:[%s0 + $0x30] sm:$0xff]
    %v71 = vld [vmem:[%s0 + $0x38] sm:$0xff]
    %v72 = vld [vmem:[%s0 + $0x40] sm:$0xff]
    %v73 = vld [vmem:[%s0 + $0x48] sm:$0xff]
    %v74 = vld [vmem:[%s0 + $0x50] sm:$0xff]
    %v75 = vld [vmem:[%s0 + $0x58] sm:$0xff]
    %v76 = vld [vmem:[%s0 + $0x60] sm:$0xff]
    %v77 = vld [vmem:[%s0 + $0x68] sm:$0xff]
    %v78 = vld [vmem:[%s0 + $0x70] sm:$0xff]
    %v79 = vld [vmem:[%s0 + $0x78] sm:$0xff]
    %v80 = vld [vmem:[%s1] sm:$0xff]
    %v81 = vld [vmem:[%s1 + $0x8] sm:$0xff]
    %v82 = vld [vmem:[%s1 + $0x10] sm:$0xff]
    %v83 = vld [vmem:[%s1 + $0x18] sm:$0xff]
    %v84 = vld [vmem:[%s2] sm:$0xff]
    %v85 = vld [vmem:[%s2 + $0x8] sm:$0xff]
    %v86 = vld [vmem:[%s2 + $0x10] sm:$0xff]
    %v87 = vld [vmem:[%s2 + $0x18] sm:$0xff]
    %v88 = vld [vmem:[%s2 + $0x20] sm:$0xff]
    %v89 = vld [vmem:[%s2 + $0x28] sm:$0xff]
    %v90 = vld [vmem:[%s2 + $0x30] sm:$0xff]
    %v91 = vld [vmem:[%s2 + $0x38] sm:$0xff]
    %v92 = vld [vmem:[%s2 + $0x40] sm:$0xff]
    %v93 = vld [vmem:[%s2 + $0x48] sm:$0xff]
    %v94 = vld [vmem:[%s2 + $0x50] sm:$0xff]
    %v95 = vld [vmem:[%s2 + $0x58] sm:$0xff]
    %v96 = vld [vmem:[%s2 + $0x60] sm:$0xff]
    %v97 = vld [vmem:[%s2 + $0x68] sm:$0xff]
    %v98 = vld [vmem:[%s2 + $0x70] sm:$0xff]
    %v99 = vld [vmem:[%s2 + $0x78] sm:$0xff]
    %101 = vset.pattern.permute.xlu0 0
    %102 = vperm.xlu0 %101, %v84
    %v103 = vpop.permute.xlu0 %102
    %106 = vset.pattern.permute.xlu0 0
    %107 = vperm.xlu0 %106, %v85
    %v108 = vpop.permute.xlu0 %107
    %111 = vset.pattern.permute.xlu0 0
    %112 = vperm.xlu0 %111, %v86
    %v113 = vpop.permute.xlu0 %112
    %116 = vset.pattern.permute.xlu0 0
    %117 = vperm.xlu0 %116, %v87
    %v118 = vpop.permute.xlu0 %117
    %121 = vset.pattern.permute.xlu0 0
    %122 = vperm.xlu0 %121, %v88
    %v123 = vpop.permute.xlu0 %122
    %126 = vset.pattern.permute.xlu0 0
    %127 = vperm.xlu0 %126, %v89
    %v128 = vpop.permute.xlu0 %127
    %131 = vset.pattern.permute.xlu0 0
    %132 = vperm.xlu0 %131, %v90
    %v133 = vpop.permute.xlu0 %132
    %136 = vset.pattern.permute.xlu0 0
    %137 = vperm.xlu0 %136, %v91
    %v138 = vpop.permute.xlu0 %137
    %141 = vset.pattern.permute.xlu0 0
    %142 = vperm.xlu0 %141, %v92
    %v143 = vpop.permute.xlu0 %142
    %146 = vset.pattern.permute.xlu0 0
    %147 = vperm.xlu0 %146, %v93
    %v148 = vpop.permute.xlu0 %147
    %151 = vset.pattern.permute.xlu0 0
    %152 = vperm.xlu0 %151, %v94
    %v153 = vpop.permute.xlu0 %152
    %156 = vset.pattern.permute.xlu0 0
    %157 = vperm.xlu0 %156, %v95
    %v158 = vpop.permute.xlu0 %157
    %161 = vset.pattern.permute.xlu0 0
    %162 = vperm.xlu0 %161, %v96
    %v163 = vpop.permute.xlu0 %162
    %166 = vset.pattern.permute.xlu0 0
    %167 = vperm.xlu0 %166, %v97
    %v168 = vpop.permute.xlu0 %167
    %171 = vset.pattern.permute.xlu0 0
    %172 = vperm.xlu0 %171, %v98
    %v173 = vpop.permute.xlu0 %172
    %176 = vset.pattern.permute.xlu0 0
    %177 = vperm.xlu0 %176, %v99
    %v178 = vpop.permute.xlu0 %177
    %vm180 = vcmask 261120
    %v182 = vsel %vm180, %v64, 0
    %v185 = vsel %vm180, %v65, 0
    %v188 = vsel %vm180, %v66, 0
    %v191 = vsel %vm180, %v67, 0
    %v194 = vsel %vm180, %v68, 0
    %v197 = vsel %vm180, %v69, 0
    %v200 = vsel %vm180, %v70, 0
    %v203 = vsel %vm180, %v71, 0
    %v206 = vsel %vm180, %v72, 0
    %v209 = vsel %vm180, %v73, 0
    %v212 = vsel %vm180, %v74, 0
    %v215 = vsel %vm180, %v75, 0
    %v218 = vsel %vm180, %v76, 0
    %v221 = vsel %vm180, %v77, 0
    %v224 = vsel %vm180, %v78, 0
    %v227 = vsel %vm180, %v79, 0
    %229 = vmatprep.subr.mxu0 0.0
    %230 = vmatpush1.msra.mxu0 %v80
    %231 = vmatprep.subr.mxu0 0.0
    %232 = vmatpush1.msra.mxu0 %v81
    %233 = vmatprep.subr.mxu0 0.0
    %234 = vmatpush1.msra.mxu0 %v82
    %235 = vmatprep.subr.mxu0 0.0
    %236 = vmatpush1.msra.mxu0 %v83
    %237 = vmatprep.subr.mxu0 0.0
    %238 = vmatpush1.msra.mxu0 0.0
    %239 = vmatprep.subr.mxu0 0.0
    %240 = vmatpush1.msra.mxu0 0.0
    %241 = vmatprep.subr.mxu0 0.0
    %242 = vmatpush1.msra.mxu0 0.0
    %243 = vmatprep.subr.mxu0 0.0
    %244 = vmatpush1.msra.mxu0 0.0
    %245 = vmatprep.subr.mxu0 0.0
    %246 = vmatpush1.msra.mxu0 0.0
    %247 = vmatprep.subr.mxu0 0.0
    %248 = vmatpush1.msra.mxu0 0.0
    %249 = vmatprep.subr.mxu0 0.0
    %250 = vmatpush1.msra.mxu0 0.0
    %251 = vmatprep.subr.mxu0 0.0
    %252 = vmatpush1.msra.mxu0 0.0
    %253 = vmatprep.subr.mxu0 0.0
    %254 = vmatpush1.msra.mxu0 0.0
    %255 = vmatprep.subr.mxu0 0.0
    %256 = vmatpush1.msra.mxu0 0.0
    %257 = vmatprep.subr.mxu0 0.0
    %258 = vmatpush1.msra.mxu0 0.0
    %259 = vmatprep.subr.mxu0 0.0
    %260 = vmatpush1.msra.mxu0 0.0
    %261 = vmatprep.subr.mxu0 0.0
    %262 = vmatpush1.msra.mxu0 0.0
    %263 = vmatprep.subr.mxu0 0.0
    %264 = vmatpush1.msra.mxu0 0.0
    %265 = vmatprep.subr.mxu0 0.0
    %266 = vmatpush1.msra.mxu0 0.0
    %267 = vmatprep.subr.mxu0 0.0
    %268 = vmatpush1.msra.mxu0 0.0
    %269 = vmatprep.subr.mxu0 0.0
    %270 = vmatpush1.msra.mxu0 0.0
    %271 = vmatprep.subr.mxu0 0.0
    %272 = vmatpush1.msra.mxu0 0.0
    %273 = vmatprep.subr.mxu0 0.0
    %274 = vmatpush1.msra.mxu0 0.0
    %275 = vmatprep.subr.mxu0 0.0
    %276 = vmatpush1.msra.mxu0 0.0
    %277 = vmatprep.subr.mxu0 0.0
    %278 = vmatpush1.msra.mxu0 0.0
    %279 = vmatprep.subr.mxu0 0.0
    %280 = vmatpush1.msra.mxu0 0.0
    %281 = vmatprep.subr.mxu0 0.0
    %282 = vmatpush1.msra.mxu0 0.0
    %283 = vmatprep.subr.mxu0 0.0
    %284 = vmatpush1.msra.mxu0 0.0
    %285 = vmatprep.subr.mxu0 0.0
    %286 = vmatpush1.msra.mxu0 0.0
    %287 = vmatprep.subr.mxu0 0.0
    %288 = vmatpush1.msra.mxu0 0.0
    %289 = vmatprep.subr.mxu0 0.0
    %290 = vmatpush1.msra.mxu0 0.0
    %291 = vmatprep.subr.mxu0 0.0
    %292 = vmatpush1.msra.mxu0 0.0
    %293 = vmatprep.mubr.f32.mxu0 0.0
    %294 = vmatmul.mubr.f32.gmra.mrb[0].mxu0 %v182
    %v295 = vpop.f32.mrb[0].mxu0
    %v296 = vadd.f32 %v103, %v295
    %v297 = vpop.f32.mrb[0].mxu0
    %298 = vmatprep.mubr.f32.mxu0 0.0
    %299 = vmatmul.mubr.f32.gmra.mrb[0].mxu0 %v185
    %v300 = vpop.f32.mrb[0].mxu0
    %v301 = vadd.f32 %v108, %v300
    %v302 = vpop.f32.mrb[0].mxu0
    %303 = vmatprep.mubr.f32.mxu0 0.0
    %304 = vmatmul.mubr.f32.gmra.mrb[0].mxu0 %v188
    %v305 = vpop.f32.mrb[0].mxu0
    %v306 = vadd.f32 %v113, %v305
    %v307 = vpop.f32.mrb[0].mxu0
    %308 = vmatprep.mubr.f32.mxu0 0.0
    %309 = vmatmul.mubr.f32.gmra.mrb[0].mxu0 %v191
    %v310 = vpop.f32.mrb[0].mxu0
    %v311 = vadd.f32 %v118, %v310
    %v312 = vpop.f32.mrb[0].mxu0
    %313 = vmatprep.mubr.f32.mxu0 0.0
    %314 = vmatmul.mubr.f32.gmra.mrb[0].mxu0 %v194
    %v315 = vpop.f32.mrb[0].mxu0
    %v316 = vadd.f32 %v123, %v315
    %v317 = vpop.f32.mrb[0].mxu0
    %318 = vmatprep.mubr.f32.mxu0 0.0
    %319 = vmatmul.mubr.f32.gmra.mrb[0].mxu0 %v197
    %v320 = vpop.f32.mrb[0].mxu0
    %v321 = vadd.f32 %v128, %v320
    %v322 = vpop.f32.mrb[0].mxu0
    %323 = vmatprep.mubr.f32.mxu0 0.0
    %324 = vmatmul.mubr.f32.gmra.mrb[0].mxu0 %v200
    %v325 = vpop.f32.mrb[0].mxu0
    %v326 = vadd.f32 %v133, %v325
    %v327 = vpop.f32.mrb[0].mxu0
    %328 = vmatprep.mubr.f32.mxu0 0.0
    %329 = vmatmul.mubr.f32.gmra.mrb[0].mxu0 %v203
    %v330 = vpop.f32.mrb[0].mxu0
    %v331 = vadd.f32 %v138, %v330
    %v332 = vpop.f32.mrb[0].mxu0
    %333 = vmatprep.mubr.f32.mxu0 0.0
    %334 = vmatmul.mubr.f32.gmra.mrb[0].mxu0 %v206
    %v335 = vpop.f32.mrb[0].mxu0
    %v336 = vadd.f32 %v143, %v335
    %v337 = vpop.f32.mrb[0].mxu0
    %338 = vmatprep.mubr.f32.mxu0 0.0
    %339 = vmatmul.mubr.f32.gmra.mrb[0].mxu0 %v209
    %v340 = vpop.f32.mrb[0].mxu0
    %v341 = vadd.f32 %v148, %v340
    %v342 = vpop.f32.mrb[0].mxu0
    %343 = vmatprep.mubr.f32.mxu0 0.0
    %344 = vmatmul.mubr.f32.gmra.mrb[0].mxu0 %v212
    %v345 = vpop.f32.mrb[0].mxu0
    %v346 = vadd.f32 %v153, %v345
    %v347 = vpop.f32.mrb[0].mxu0
    %348 = vmatprep.mubr.f32.mxu0 0.0
    %349 = vmatmul.mubr.f32.gmra.mrb[0].mxu0 %v215
    %v350 = vpop.f32.mrb[0].mxu0
    %v351 = vadd.f32 %v158, %v350
    %v352 = vpop.f32.mrb[0].mxu0
    %353 = vmatprep.mubr.f32.mxu0 0.0
    %354 = vmatmul.mubr.f32.gmra.mrb[0].mxu0 %v218
    %v355 = vpop.f32.mrb[0].mxu0
    %v356 = vadd.f32 %v163, %v355
    %v357 = vpop.f32.mrb[0].mxu0
    %358 = vmatprep.mubr.f32.mxu0 0.0
    %359 = vmatmul.mubr.f32.gmra.mrb[0].mxu0 %v221
    %v360 = vpop.f32.mrb[0].mxu0
    %v361 = vadd.f32 %v168, %v360
    %v362 = vpop.f32.mrb[0].mxu0
    %363 = vmatprep.mubr.f32.mxu0 0.0
    %364 = vmatmul.mubr.f32.gmra.mrb[0].mxu0 %v224
    %v365 = vpop.f32.mrb[0].mxu0
    %v366 = vadd.f32 %v173, %v365
    %v367 = vpop.f32.mrb[0].mxu0
    %368 = vmatprep.mubr.f32.mxu0 0.0
    %369 = vmatmul.mubr.f32.gmra.mrb[0].mxu0 %v227
    %v370 = vpop.f32.mrb[0].mxu0
    %v371 = vadd.f32 %v178, %v370
    %v372 = vpop.f32.mrb[0].mxu0
    %373 = vdwg.mxu0
    %v374 = vld [vmem:[%s3] sm:$0x1]
    %v376 = vlaneseq
    %v377 = vshrl.u32 %v376, 7
    %v378 = vsub.s32 0, %v377
    %v379 = vrot.slane %v374, %v378
    %v381 = vadd.f32 %v296, %v379
    %v382 = vadd.f32 %v301, %v379
    %v383 = vadd.f32 %v306, %v379
    %v384 = vadd.f32 %v311, %v379
    %v385 = vadd.f32 %v316, %v379
    %v386 = vadd.f32 %v321, %v379
    %v387 = vadd.f32 %v326, %v379
    %v388 = vadd.f32 %v331, %v379
    %v389 = vadd.f32 %v336, %v379
    %v390 = vadd.f32 %v341, %v379
    %v391 = vadd.f32 %v346, %v379
    %v392 = vadd.f32 %v351, %v379
    %v393 = vadd.f32 %v356, %v379
    %v394 = vadd.f32 %v361, %v379
    %v395 = vadd.f32 %v366, %v379
    %v396 = vadd.f32 %v371, %v379
    %v397 = vmul.f32 %v381, 1.442695
    %v398 = vpow.pop %v397
    %v399 = vmul.f32 %v382, 1.442695
    %v400 = vpow.pop %v399
    %v401 = vmul.f32 %v383, 1.442695
    %v402 = vpow.pop %v401
    %v403 = vmul.f32 %v384, 1.442695
    %v404 = vpow.pop %v403
    %v405 = vmul.f32 %v385, 1.442695
    %v406 = vpow.pop %v405
    %v407 = vmul.f32 %v386, 1.442695
    %v408 = vpow.pop %v407
    %v409 = vmul.f32 %v387, 1.442695
    %v410 = vpow.pop %v409
    %v411 = vmul.f32 %v388, 1.442695
    %v412 = vpow.pop %v411
    %v413 = vmul.f32 %v389, 1.442695
    %v414 = vpow.pop %v413
    %v415 = vmul.f32 %v390, 1.442695
    %v416 = vpow.pop %v415
    %v417 = vmul.f32 %v391, 1.442695
    %v418 = vpow.pop %v417
    %v419 = vmul.f32 %v392, 1.442695
    %v420 = vpow.pop %v419
    %v421 = vmul.f32 %v393, 1.442695
    %v422 = vpow.pop %v421
    %v423 = vmul.f32 %v394, 1.442695
    %v424 = vpow.pop %v423
    %v425 = vmul.f32 %v395, 1.442695
    %v426 = vpow.pop %v425
    %v427 = vmul.f32 %v396, 1.442695
    %v428 = vpow.pop %v427
    %429 = vst [vmem:[#allocation4] sm:$0xff] %v398
    %430 = vst [vmem:[#allocation4 + $0x8] sm:$0xff] %v400
    %431 = vst [vmem:[#allocation4 + $0x10] sm:$0xff] %v402
    %432 = vst [vmem:[#allocation4 + $0x18] sm:$0xff] %v404
    %433 = vst [vmem:[#allocation4 + $0x20] sm:$0xff] %v406
    %434 = vst [vmem:[#allocation4 + $0x28] sm:$0xff] %v408
    %435 = vst [vmem:[#allocation4 + $0x30] sm:$0xff] %v410
    %436 = vst [vmem:[#allocation4 + $0x38] sm:$0xff] %v412
    %437 = vst [vmem:[#allocation4 + $0x40] sm:$0xff] %v414
    %438 = vst [vmem:[#allocation4 + $0x48] sm:$0xff] %v416
    %439 = vst [vmem:[#allocation4 + $0x50] sm:$0xff] %v418
    %440 = vst [vmem:[#allocation4 + $0x58] sm:$0xff] %v420
    %441 = vst [vmem:[#allocation4 + $0x60] sm:$0xff] %v422
    %442 = vst [vmem:[#allocation4 + $0x68] sm:$0xff] %v424
    %443 = vst [vmem:[#allocation4 + $0x70] sm:$0xff] %v426
    %444 = vst [vmem:[#allocation4 + $0x78] sm:$0xff] %v428
    %s445 = smul.u32 0, 128
    %v446 = vlaneseq
    %v447 = vshrl.u32 %v446, 7
    %v448 = vadd.s32 %v447, 8
    %v449 = vadd.s32 %v447, 16
    %v450 = vadd.s32 %v447, 24
    %v451 = vadd.s32 %v447, 32
    %v452 = vadd.s32 %v447, 40
    %v453 = vadd.s32 %v447, 48
    %v454 = vadd.s32 %v447, 56
    %v455 = vadd.s32 %v447, 64
    %v456 = vadd.s32 %v447, 72
    %v457 = vadd.s32 %v447, 80
    %v458 = vadd.s32 %v447, 88
    %v459 = vadd.s32 %v447, 96
    %v460 = vadd.s32 %v447, 104
    %v461 = vadd.s32 %v447, 112
    %v462 = vadd.s32 %v447, 120
    %v463 = vstv %s445
    %v464 = vadd.s32 %v463, %v447
    %v465 = vadd.s32 %v463, %v448
    %v466 = vadd.s32 %v463, %v449
    %v467 = vadd.s32 %v463, %v450
    %v468 = vadd.s32 %v463, %v451
    %v469 = vadd.s32 %v463, %v452
    %v470 = vadd.s32 %v463, %v453
    %v471 = vadd.s32 %v463, %v454
    %v472 = vadd.s32 %v463, %v455
    %v473 = vadd.s32 %v463, %v456
    %v474 = vadd.s32 %v463, %v457
    %v475 = vadd.s32 %v463, %v458
    %v476 = vadd.s32 %v463, %v459
    %v477 = vadd.s32 %v463, %v460
    %v478 = vadd.s32 %v463, %v461
    %v479 = vadd.s32 %v463, %v462
    %v480 = vld [vmem:[%s5] sm:$0x1]
    %vm481 = vcmp.lt.s32.totalorder %v464, 0
    %v482 = vsub.s32 0, %v464
    %v483 = vsel %vm481, %v482, %v464
    %v484 = vshrl.u32 %v483, 6
    %v485 = vand.u32 %v483, 63
    %v486 = vsub.s32 0, %v485
    %v487 = vsel %vm481, %v486, %v485
    %vm488 = vcmp.lt.s32.totalorder %v465, 0
    %v489 = vsub.s32 0, %v465
    %v490 = vsel %vm488, %v489, %v465
    %v491 = vshrl.u32 %v490, 6
    %v492 = vand.u32 %v490, 63
    %v493 = vsub.s32 0, %v492
    %v494 = vsel %vm488, %v493, %v492
    %vm495 = vcmp.lt.s32.totalorder %v466, 0
    %v496 = vsub.s32 0, %v466
    %v497 = vsel %vm495, %v496, %v466
    %v498 = vshrl.u32 %v497, 6
    %v499 = vand.u32 %v497, 63
    %v500 = vsub.s32 0, %v499
    %v501 = vsel %vm495, %v500, %v499
    %vm502 = vcmp.lt.s32.totalorder %v467, 0
    %v503 = vsub.s32 0, %v467
    %v504 = vsel %vm502, %v503, %v467
    %v505 = vshrl.u32 %v504, 6
    %v506 = vand.u32 %v504, 63
    %v507 = vsub.s32 0, %v506
    %v508 = vsel %vm502, %v507, %v506
    %vm509 = vcmp.lt.s32.totalorder %v468, 0
    %v510 = vsub.s32 0, %v468
    %v511 = vsel %vm509, %v510, %v468
    %v512 = vshrl.u32 %v511, 6
    %v513 = vand.u32 %v511, 63
    %v514 = vsub.s32 0, %v513
    %v515 = vsel %vm509, %v514, %v513
    %vm516 = vcmp.lt.s32.totalorder %v469, 0
    %v517 = vsub.s32 0, %v469
    %v518 = vsel %vm516, %v517, %v469
    %v519 = vshrl.u32 %v518, 6
    %v520 = vand.u32 %v518, 63
    %v521 = vsub.s32 0, %v520
    %v522 = vsel %vm516, %v521, %v520
    %vm523 = vcmp.lt.s32.totalorder %v470, 0
    %v524 = vsub.s32 0, %v470
    %v525 = vsel %vm523, %v524, %v470
    %v526 = vshrl.u32 %v525, 6
    %v527 = vand.u32 %v525, 63
    %v528 = vsub.s32 0, %v527
    %v529 = vsel %vm523, %v528, %v527
    %vm530 = vcmp.lt.s32.totalorder %v471, 0
    %v531 = vsub.s32 0, %v471
    %v532 = vsel %vm530, %v531, %v471
    %v533 = vshrl.u32 %v532, 6
    %v534 = vand.u32 %v532, 63
    %v535 = vsub.s32 0, %v534
    %v536 = vsel %vm530, %v535, %v534
    %vm537 = vcmp.lt.s32.totalorder %v472, 0
    %v538 = vsub.s32 0, %v472
    %v539 = vsel %vm537, %v538, %v472
    %v540 = vshrl.u32 %v539, 6
    %v541 = vand.u32 %v539, 63
    %v542 = vsub.s32 0, %v541
    %v543 = vsel %vm537, %v542, %v541
    %vm544 = vcmp.lt.s32.totalorder %v473, 0
    %v545 = vsub.s32 0, %v473
    %v546 = vsel %vm544, %v545, %v473
    %v547 = vshrl.u32 %v546, 6
    %v548 = vand.u32 %v546, 63
    %v549 = vsub.s32 0, %v548
    %v550 = vsel %vm544, %v549, %v548
    %vm551 = vcmp.lt.s32.totalorder %v474, 0
    %v552 = vsub.s32 0, %v474
    %v553 = vsel %vm551, %v552, %v474
    %v554 = vshrl.u32 %v553, 6
    %v555 = vand.u32 %v553, 63
    %v556 = vsub.s32 0, %v555
    %v557 = vsel %vm551, %v556, %v555
    %vm558 = vcmp.lt.s32.totalorder %v475, 0
    %v559 = vsub.s32 0, %v475
    %v560 = vsel %vm558, %v559, %v475
    %v561 = vshrl.u32 %v560, 6
    %v562 = vand.u32 %v560, 63
    %v563 = vsub.s32 0, %v562
    %v564 = vsel %vm558, %v563, %v562
    %vm565 = vcmp.lt.s32.totalorder %v476, 0
    %v566 = vsub.s32 0, %v476
    %v567 = vsel %vm565, %v566, %v476
    %v568 = vshrl.u32 %v567, 6
    %v569 = vand.u32 %v567, 63
    %v570 = vsub.s32 0, %v569
    %v571 = vsel %vm565, %v570, %v569
    %vm572 = vcmp.lt.s32.totalorder %v477, 0
    %v573 = vsub.s32 0, %v477
    %v574 = vsel %vm572, %v573, %v477
    %v575 = vshrl.u32 %v574, 6
    %v576 = vand.u32 %v574, 63
    %v577 = vsub.s32 0, %v576
    %v578 = vsel %vm572, %v577, %v576
    %vm579 = vcmp.lt.s32.totalorder %v478, 0
    %v580 = vsub.s32 0, %v478
    %v581 = vsel %vm579, %v580, %v478
    %v582 = vshrl.u32 %v581, 6
    %v583 = vand.u32 %v581, 63
    %v584 = vsub.s32 0, %v583
    %v585 = vsel %vm579, %v584, %v583
    %vm586 = vcmp.lt.s32.totalorder %v479, 0
    %v587 = vsub.s32 0, %v479
    %v588 = vsel %vm586, %v587, %v479
    %v589 = vshrl.u32 %v588, 6
    %v590 = vand.u32 %v588, 63
    %v591 = vsub.s32 0, %v590
    %v592 = vsel %vm586, %v591, %v590
    %vm593 = vcmp.ne.s32.totalorder %v487, 0
    %vm594 = vcmp.ne.s32.totalorder %v494, 0
    %vm595 = vcmp.ne.s32.totalorder %v501, 0
    %vm596 = vcmp.ne.s32.totalorder %v508, 0
    %vm597 = vcmp.ne.s32.totalorder %v515, 0
    %vm598 = vcmp.ne.s32.totalorder %v522, 0
    %vm599 = vcmp.ne.s32.totalorder %v529, 0
    %vm600 = vcmp.ne.s32.totalorder %v536, 0
    %vm601 = vcmp.ne.s32.totalorder %v543, 0
    %vm602 = vcmp.ne.s32.totalorder %v550, 0
    %vm603 = vcmp.ne.s32.totalorder %v557, 0
    %vm604 = vcmp.ne.s32.totalorder %v564, 0
    %vm605 = vcmp.ne.s32.totalorder %v571, 0
    %vm606 = vcmp.ne.s32.totalorder %v578, 0
    %vm607 = vcmp.ne.s32.totalorder %v585, 0
    %vm608 = vcmp.ne.s32.totalorder %v592, 0
    %vm609 = vcmp.lt.s32.totalorder %v487, 0
    %vm610 = vcmp.lt.s32.totalorder %v494, 0
    %vm611 = vcmp.lt.s32.totalorder %v501, 0
    %vm612 = vcmp.lt.s32.totalorder %v508, 0
    %vm613 = vcmp.lt.s32.totalorder %v515, 0
    %vm614 = vcmp.lt.s32.totalorder %v522, 0
    %vm615 = vcmp.lt.s32.totalorder %v529, 0
    %vm616 = vcmp.lt.s32.totalorder %v536, 0
    %vm617 = vcmp.lt.s32.totalorder %v543, 0
    %vm618 = vcmp.lt.s32.totalorder %v550, 0
    %vm619 = vcmp.lt.s32.totalorder %v557, 0
    %vm620 = vcmp.lt.s32.totalorder %v564, 0
    %vm621 = vcmp.lt.s32.totalorder %v571, 0
    %vm622 = vcmp.lt.s32.totalorder %v578, 0
    %vm623 = vcmp.lt.s32.totalorder %v585, 0
    %vm624 = vcmp.lt.s32.totalorder %v592, 0
    %vm625 = vmand %vm609, %vm593
    %vm626 = vmand %vm610, %vm594
    %vm627 = vmand %vm611, %vm595
    %vm628 = vmand %vm612, %vm596
    %vm629 = vmand %vm613, %vm597
    %vm630 = vmand %vm614, %vm598
    %vm631 = vmand %vm615, %vm599
    %vm632 = vmand %vm616, %vm600
    %vm633 = vmand %vm617, %vm601
    %vm634 = vmand %vm618, %vm602
    %vm635 = vmand %vm619, %vm603
    %vm636 = vmand %vm620, %vm604
    %vm637 = vmand %vm621, %vm605
    %vm638 = vmand %vm622, %vm606
    %vm639 = vmand %vm623, %vm607
    %vm640 = vmand %vm624, %vm608
    %v641 = vadd.s32 %v487, 64
    %v642 = vadd.s32 %v494, 64
    %v643 = vadd.s32 %v501, 64
    %v644 = vadd.s32 %v508, 64
    %v645 = vadd.s32 %v515, 64
    %v646 = vadd.s32 %v522, 64
    %v647 = vadd.s32 %v529, 64
    %v648 = vadd.s32 %v536, 64
    %v649 = vadd.s32 %v543, 64
    %v650 = vadd.s32 %v550, 64
    %v651 = vadd.s32 %v557, 64
    %v652 = vadd.s32 %v564, 64
    %v653 = vadd.s32 %v571, 64
    %v654 = vadd.s32 %v578, 64
    %v655 = vadd.s32 %v585, 64
    %v656 = vadd.s32 %v592, 64
    %v657 = vsel %vm625, %v641, %v487
    %v658 = vsel %vm626, %v642, %v494
    %v659 = vsel %vm627, %v643, %v501
    %v660 = vsel %vm628, %v644, %v508
    %v661 = vsel %vm629, %v645, %v515
    %v662 = vsel %vm630, %v646, %v522
    %v663 = vsel %vm631, %v647, %v529
    %v664 = vsel %vm632, %v648, %v536
    %v665 = vsel %vm633, %v649, %v543
    %v666 = vsel %vm634, %v650, %v550
    %v667 = vsel %vm635, %v651, %v557
    %v668 = vsel %vm636, %v652, %v564
    %v669 = vsel %vm637, %v653, %v571
    %v670 = vsel %vm638, %v654, %v578
    %v671 = vsel %vm639, %v655, %v585
    %v672 = vsel %vm640, %v656, %v592
    %v673 = vlaneseq
    %v674 = vshrl.u32 %v673, 7
    %v675 = vsub.s32 0, %v674
    %v676 = vrot.slane %v480, %v675
    %vm677 = vcmp.eq.s32.totalorder %v676, %v657
    %vm678 = vcmp.eq.s32.totalorder %v676, %v658
    %vm679 = vcmp.eq.s32.totalorder %v676, %v659
    %vm680 = vcmp.eq.s32.totalorder %v676, %v660
    %vm681 = vcmp.eq.s32.totalorder %v676, %v661
    %vm682 = vcmp.eq.s32.totalorder %v676, %v662
    %vm683 = vcmp.eq.s32.totalorder %v676, %v663
    %vm684 = vcmp.eq.s32.totalorder %v676, %v664
    %vm685 = vcmp.eq.s32.totalorder %v676, %v665
    %vm686 = vcmp.eq.s32.totalorder %v676, %v666
    %vm687 = vcmp.eq.s32.totalorder %v676, %v667
    %vm688 = vcmp.eq.s32.totalorder %v676, %v668
    %vm689 = vcmp.eq.s32.totalorder %v676, %v669
    %vm690 = vcmp.eq.s32.totalorder %v676, %v670
    %vm691 = vcmp.eq.s32.totalorder %v676, %v671
    %vm692 = vcmp.eq.s32.totalorder %v676, %v672
    %v693 = vsel %vm677, %v398, 0.0
    %v694 = vsel %vm678, %v400, 0.0
    %v695 = vsel %vm679, %v402, 0.0
    %v696 = vsel %vm680, %v404, 0.0
    %v697 = vsel %vm681, %v406, 0.0
    %v698 = vsel %vm682, %v408, 0.0
    %v699 = vsel %vm683, %v410, 0.0
    %v700 = vsel %vm684, %v412, 0.0
    %v701 = vsel %vm685, %v414, 0.0
    %v702 = vsel %vm686, %v416, 0.0
    %v703 = vsel %vm687, %v418, 0.0
    %v704 = vsel %vm688, %v420, 0.0
    %v705 = vsel %vm689, %v422, 0.0
    %v706 = vsel %vm690, %v424, 0.0
    %v707 = vsel %vm691, %v426, 0.0
    %v708 = vsel %vm692, %v428, 0.0
    %709 = vadd.xlane.f32.xlu0 %v693
    %v710 = vpop.xlane.xlu0 %709
    %711 = vadd.xlane.f32.xlu0 %v694
    %v712 = vpop.xlane.xlu0 %711
    %713 = vadd.xlane.f32.xlu0 %v695
    %v714 = vpop.xlane.xlu0 %713
    %715 = vadd.xlane.f32.xlu0 %v696
    %v716 = vpop.xlane.xlu0 %715
    %717 = vadd.xlane.f32.xlu0 %v697
    %v718 = vpop.xlane.xlu0 %717
    %719 = vadd.xlane.f32.xlu0 %v698
    %v720 = vpop.xlane.xlu0 %719
    %721 = vadd.xlane.f32.xlu0 %v699
    %v722 = vpop.xlane.xlu0 %721
    %723 = vadd.xlane.f32.xlu0 %v700
    %v724 = vpop.xlane.xlu0 %723
    %725 = vadd.xlane.f32.xlu0 %v701
    %v726 = vpop.xlane.xlu0 %725
    %727 = vadd.xlane.f32.xlu0 %v702
    %v728 = vpop.xlane.xlu0 %727
    %729 = vadd.xlane.f32.xlu0 %v703
    %v730 = vpop.xlane.xlu0 %729
    %731 = vadd.xlane.f32.xlu0 %v704
    %v732 = vpop.xlane.xlu0 %731
    %733 = vadd.xlane.f32.xlu0 %v705
    %v734 = vpop.xlane.xlu0 %733
    %735 = vadd.xlane.f32.xlu0 %v706
    %v736 = vpop.xlane.xlu0 %735
    %737 = vadd.xlane.f32.xlu0 %v707
    %v738 = vpop.xlane.xlu0 %737
    %739 = vadd.xlane.f32.xlu0 %v708
    %v740 = vpop.xlane.xlu0 %739
    %v741 = vmul.f32 %v398, 1.442695
    %v742 = vpow.pop %v741
    %v743 = vmul.f32 %v400, 1.442695
    %v744 = vpow.pop %v743
    %v745 = vmul.f32 %v402, 1.442695
    %v746 = vpow.pop %v745
    %v747 = vmul.f32 %v404, 1.442695
    %v748 = vpow.pop %v747
    %v749 = vmul.f32 %v406, 1.442695
    %v750 = vpow.pop %v749
    %v751 = vmul.f32 %v408, 1.442695
    %v752 = vpow.pop %v751
    %v753 = vmul.f32 %v410, 1.442695
    %v754 = vpow.pop %v753
    %v755 = vmul.f32 %v412, 1.442695
    %v756 = vpow.pop %v755
    %v757 = vmul.f32 %v414, 1.442695
    %v758 = vpow.pop %v757
    %v759 = vmul.f32 %v416, 1.442695
    %v760 = vpow.pop %v759
    %v761 = vmul.f32 %v418, 1.442695
    %v762 = vpow.pop %v761
    %v763 = vmul.f32 %v420, 1.442695
    %v764 = vpow.pop %v763
    %v765 = vmul.f32 %v422, 1.442695
    %v766 = vpow.pop %v765
    %v767 = vmul.f32 %v424, 1.442695
    %v768 = vpow.pop %v767
    %v769 = vmul.f32 %v426, 1.442695
    %v770 = vpow.pop %v769
    %v771 = vmul.f32 %v428, 1.442695
    %v772 = vpow.pop %v771
    %773 = vadd.xlane.f32.xlu0 %v742
    %v774 = vpop.xlane.xlu0 %773
    %775 = vadd.xlane.f32.xlu0 %v744
    %v776 = vpop.xlane.xlu0 %775
    %777 = vadd.xlane.f32.xlu0 %v746
    %v778 = vpop.xlane.xlu0 %777
    %779 = vadd.xlane.f32.xlu0 %v748
    %v780 = vpop.xlane.xlu0 %779
    %781 = vadd.xlane.f32.xlu0 %v750
    %v782 = vpop.xlane.xlu0 %781
    %783 = vadd.xlane.f32.xlu0 %v752
    %v784 = vpop.xlane.xlu0 %783
    %785 = vadd.xlane.f32.xlu0 %v754
    %v786 = vpop.xlane.xlu0 %785
    %787 = vadd.xlane.f32.xlu0 %v756
    %v788 = vpop.xlane.xlu0 %787
    %789 = vadd.xlane.f32.xlu0 %v758
    %v790 = vpop.xlane.xlu0 %789
    %791 = vadd.xlane.f32.xlu0 %v760
    %v792 = vpop.xlane.xlu0 %791
    %793 = vadd.xlane.f32.xlu0 %v762
    %v794 = vpop.xlane.xlu0 %793
    %795 = vadd.xlane.f32.xlu0 %v764
    %v796 = vpop.xlane.xlu0 %795
    %797 = vadd.xlane.f32.xlu0 %v766
    %v798 = vpop.xlane.xlu0 %797
    %799 = vadd.xlane.f32.xlu0 %v768
    %v800 = vpop.xlane.xlu0 %799
    %801 = vadd.xlane.f32.xlu0 %v770
    %v802 = vpop.xlane.xlu0 %801
    %803 = vadd.xlane.f32.xlu0 %v772
    %v804 = vpop.xlane.xlu0 %803
    %s805 = smul.u32 0, 128
    %s806 = sadd.s32 %s445, 128
    %p807 = scmp.lt.s32.totalorder %s805, %s806
    %s808 = sadd.s32 %s805, 128
    %p809 = scmp.lt.s32.totalorder %s445, %s808
    %p810 = pnand %p807, %p809
    %p811 = pneg %p810
    // Predicated region
    $region30: #{tpu_custom_call.1} parent=1 // pred_check
      _
    $region31: #{tpu_custom_call.1} parent=1 // pred_check_branch
      %813 = sbr.rel (%p810) target = $region33
    $region32: #{tpu_custom_call.1} parent=1 // pred_region
      %v814 = vld [vmem:[%s4] sm:$0x1]
      %v815 = vlaneseq
      %v816 = vshrl.u32 %v815, 7
      %v817 = vsub.s32 0, %v816
      %v818 = vrot.slane %v814, %v817
      %vm819 = vcmp.eq.s32.totalorder %v818, %v464
      %vm820 = vcmp.eq.s32.totalorder %v818, %v465
      %vm821 = vcmp.eq.s32.totalorder %v818, %v466
      %vm822 = vcmp.eq.s32.totalorder %v818, %v467
      %vm823 = vcmp.eq.s32.totalorder %v818, %v468
      %vm824 = vcmp.eq.s32.totalorder %v818, %v469
      %vm825 = vcmp.eq.s32.totalorder %v818, %v470
      %vm826 = vcmp.eq.s32.totalorder %v818, %v471
      %vm827 = vcmp.eq.s32.totalorder %v818, %v472
      %vm828 = vcmp.eq.s32.totalorder %v818, %v473
      %vm829 = vcmp.eq.s32.totalorder %v818, %v474
      %vm830 = vcmp.eq.s32.totalorder %v818, %v475
      %vm831 = vcmp.eq.s32.totalorder %v818, %v476
      %vm832 = vcmp.eq.s32.totalorder %v818, %v477
      %vm833 = vcmp.eq.s32.totalorder %v818, %v478
      %vm834 = vcmp.eq.s32.totalorder %v818, %v479
      %v835 = vsel %vm819, %v398, 0.0
      %v836 = vsel %vm820, %v400, 0.0
      %v837 = vsel %vm821, %v402, 0.0
      %v838 = vsel %vm822, %v404, 0.0
      %v839 = vsel %vm823, %v406, 0.0
      %v840 = vsel %vm824, %v408, 0.0
      %v841 = vsel %vm825, %v410, 0.0
      %v842 = vsel %vm826, %v412, 0.0
      %v843 = vsel %vm827, %v414, 0.0
      %v844 = vsel %vm828, %v416, 0.0
      %v845 = vsel %vm829, %v418, 0.0
      %v846 = vsel %vm830, %v420, 0.0
      %v847 = vsel %vm831, %v422, 0.0
      %v848 = vsel %vm832, %v424, 0.0
      %v849 = vsel %vm833, %v426, 0.0
      %v850 = vsel %vm834, %v428, 0.0
      %851 = vadd.xlane.f32.xlu0 %v835
      %v852 = vpop.xlane.xlu0 %851
      %853 = vadd.xlane.f32.xlu0 %v836
      %v854 = vpop.xlane.xlu0 %853
      %855 = vadd.xlane.f32.xlu0 %v837
      %v856 = vpop.xlane.xlu0 %855
      %857 = vadd.xlane.f32.xlu0 %v838
      %v858 = vpop.xlane.xlu0 %857
      %859 = vadd.xlane.f32.xlu0 %v839
      %v860 = vpop.xlane.xlu0 %859
      %861 = vadd.xlane.f32.xlu0 %v840
      %v862 = vpop.xlane.xlu0 %861
      %863 = vadd.xlane.f32.xlu0 %v841
      %v864 = vpop.xlane.xlu0 %863
      %865 = vadd.xlane.f32.xlu0 %v842
      %v866 = vpop.xlane.xlu0 %865
      %867 = vadd.xlane.f32.xlu0 %v843
      %v868 = vpop.xlane.xlu0 %867
      %869 = vadd.xlane.f32.xlu0 %v844
      %v870 = vpop.xlane.xlu0 %869
      %871 = vadd.xlane.f32.xlu0 %v845
      %v872 = vpop.xlane.xlu0 %871
      %873 = vadd.xlane.f32.xlu0 %v846
      %v874 = vpop.xlane.xlu0 %873
      %875 = vadd.xlane.f32.xlu0 %v847
      %v876 = vpop.xlane.xlu0 %875
      %877 = vadd.xlane.f32.xlu0 %v848
      %v878 = vpop.xlane.xlu0 %877
      %879 = vadd.xlane.f32.xlu0 %v849
      %v880 = vpop.xlane.xlu0 %879
      %881 = vadd.xlane.f32.xlu0 %v850
      %v882 = vpop.xlane.xlu0 %881
      %v883 = vsel %vm819, %v742, 0.0
      %v884 = vsel %vm820, %v744, 0.0
      %v885 = vsel %vm821, %v746, 0.0
      %v886 = vsel %vm822, %v748, 0.0
      %v887 = vsel %vm823, %v750, 0.0
      %v888 = vsel %vm824, %v752, 0.0
      %v889 = vsel %vm825, %v754, 0.0
      %v890 = vsel %vm826, %v756, 0.0
      %v891 = vsel %vm827, %v758, 0.0
      %v892 = vsel %vm828, %v760, 0.0
      %v893 = vsel %vm829, %v762, 0.0
      %v894 = vsel %vm830, %v764, 0.0
      %v895 = vsel %vm831, %v766, 0.0
      %v896 = vsel %vm832, %v768, 0.0
      %v897 = vsel %vm833, %v770, 0.0
      %v898 = vsel %vm834, %v772, 0.0
      %899 = vadd.xlane.f32.xlu0 %v883
      %v900 = vpop.xlane.xlu0 %899
      %901 = vadd.xlane.f32.xlu0 %v884
      %v902 = vpop.xlane.xlu0 %901
      %903 = vadd.xlane.f32.xlu0 %v885
      %v904 = vpop.xlane.xlu0 %903
      %905 = vadd.xlane.f32.xlu0 %v886
      %v906 = vpop.xlane.xlu0 %905
      %907 = vadd.xlane.f32.xlu0 %v887
      %v908 = vpop.xlane.xlu0 %907
      %909 = vadd.xlane.f32.xlu0 %v888
      %v910 = vpop.xlane.xlu0 %909
      %911 = vadd.xlane.f32.xlu0 %v889
      %v912 = vpop.xlane.xlu0 %911
      %913 = vadd.xlane.f32.xlu0 %v890
      %v914 = vpop.xlane.xlu0 %913
      %915 = vadd.xlane.f32.xlu0 %v891
      %v916 = vpop.xlane.xlu0 %915
      %917 = vadd.xlane.f32.xlu0 %v892
      %v918 = vpop.xlane.xlu0 %917
      %919 = vadd.xlane.f32.xlu0 %v893
      %v920 = vpop.xlane.xlu0 %919
      %921 = vadd.xlane.f32.xlu0 %v894
      %v922 = vpop.xlane.xlu0 %921
      %923 = vadd.xlane.f32.xlu0 %v895
      %v924 = vpop.xlane.xlu0 %923
      %925 = vadd.xlane.f32.xlu0 %v896
      %v926 = vpop.xlane.xlu0 %925
      %927 = vadd.xlane.f32.xlu0 %v897
      %v928 = vpop.xlane.xlu0 %927
      %929 = vadd.xlane.f32.xlu0 %v898
      %v930 = vpop.xlane.xlu0 %929
      %v931 = vld [vmem:[#allocation2] sm:$0xff]
      %v932 = vld [vmem:[#allocation2 + $0x8] sm:$0xff]
      %v933 = vld [vmem:[#allocation2 + $0x10] sm:$0xff]
      %v934 = vld [vmem:[#allocation2 + $0x18] sm:$0xff]
      %v935 = vld [vmem:[#allocation2 + $0x20] sm:$0xff]
      %v936 = vld [vmem:[#allocation2 + $0x28] sm:$0xff]
      %v937 = vld [vmem:[#allocation2 + $0x30] sm:$0xff]
      %v938 = vld [vmem:[#allocation2 + $0x38] sm:$0xff]
      %v939 = vld [vmem:[#allocation2 + $0x40] sm:$0xff]
      %v940 = vld [vmem:[#allocation2 + $0x48] sm:$0xff]
      %v941 = vld [vmem:[#allocation2 + $0x50] sm:$0xff]
      %v942 = vld [vmem:[#allocation2 + $0x58] sm:$0xff]
      %v943 = vld [vmem:[#allocation2 + $0x60] sm:$0xff]
      %v944 = vld [vmem:[#allocation2 + $0x68] sm:$0xff]
      %v945 = vld [vmem:[#allocation2 + $0x70] sm:$0xff]
      %v946 = vld [vmem:[#allocation2 + $0x78] sm:$0xff]
      %v947 = vsub.f32 %v710, %v852
      %v948 = vsub.f32 %v712, %v854
      %v949 = vsub.f32 %v714, %v856
      %v950 = vsub.f32 %v716, %v858
      %v951 = vsub.f32 %v718, %v860
      %v952 = vsub.f32 %v720, %v862
      %v953 = vsub.f32 %v722, %v864
      %v954 = vsub.f32 %v724, %v866
      %v955 = vsub.f32 %v726, %v868
      %v956 = vsub.f32 %v728, %v870
      %v957 = vsub.f32 %v730, %v872
      %v958 = vsub.f32 %v732, %v874
      %v959 = vsub.f32 %v734, %v876
      %v960 = vsub.f32 %v736, %v878
      %v961 = vsub.f32 %v738, %v880
      %v962 = vsub.f32 %v740, %v882
      %v963 = vadd.f32 %v931, %v947
      %v964 = vadd.f32 %v932, %v948
      %v965 = vadd.f32 %v933, %v949
      %v966 = vadd.f32 %v934, %v950
      %v967 = vadd.f32 %v935, %v951
      %v968 = vadd.f32 %v936, %v952
      %v969 = vadd.f32 %v937, %v953
      %v970 = vadd.f32 %v938, %v954
      %v971 = vadd.f32 %v939, %v955
      %v972 = vadd.f32 %v940, %v956
      %v973 = vadd.f32 %v941, %v957
      %v974 = vadd.f32 %v942, %v958
      %v975 = vadd.f32 %v943, %v959
      %v976 = vadd.f32 %v944, %v960
      %v977 = vadd.f32 %v945, %v961
      %v978 = vadd.f32 %v946, %v962
      %vm979 = vcmask 7168
      %980 = vst.msk [vmem:[#allocation2] sm:$0xff] %vm979, %v963
      %981 = vst.msk [vmem:[#allocation2 + $0x8] sm:$0xff] %vm979, %v964
      %982 = vst.msk [vmem:[#allocation2 + $0x10] sm:$0xff] %vm979, %v965
      %983 = vst.msk [vmem:[#allocation2 + $0x18] sm:$0xff] %vm979, %v966
      %984 = vst.msk [vmem:[#allocation2 + $0x20] sm:$0xff] %vm979, %v967
      %985 = vst.msk [vmem:[#allocation2 + $0x28] sm:$0xff] %vm979, %v968
      %986 = vst.msk [vmem:[#allocation2 + $0x30] sm:$0xff] %vm979, %v969
      %987 = vst.msk [vmem:[#allocation2 + $0x38] sm:$0xff] %vm979, %v970
      %988 = vst.msk [vmem:[#allocation2 + $0x40] sm:$0xff] %vm979, %v971
      %989 = vst.msk [vmem:[#allocation2 + $0x48] sm:$0xff] %vm979, %v972
      %990 = vst.msk [vmem:[#allocation2 + $0x50] sm:$0xff] %vm979, %v973
      %991 = vst.msk [vmem:[#allocation2 + $0x58] sm:$0xff] %vm979, %v974
      %992 = vst.msk [vmem:[#allocation2 + $0x60] sm:$0xff] %vm979, %v975
      %993 = vst.msk [vmem:[#allocation2 + $0x68] sm:$0xff] %vm979, %v976
      %994 = vst.msk [vmem:[#allocation2 + $0x70] sm:$0xff] %vm979, %v977
      %995 = vst.msk [vmem:[#allocation2 + $0x78] sm:$0xff] %vm979, %v978
      %v996 = vld [vmem:[#allocation3] sm:$0xff]
      %v997 = vld [vmem:[#allocation3 + $0x8] sm:$0xff]
      %v998 = vld [vmem:[#allocation3 + $0x10] sm:$0xff]
      %v999 = vld [vmem:[#allocation3 + $0x18] sm:$0xff]
      %v1000 = vld [vmem:[#allocation3 + $0x20] sm:$0xff]
      %v1001 = vld [vmem:[#allocation3 + $0x28] sm:$0xff]
      %v1002 = vld [vmem:[#allocation3 + $0x30] sm:$0xff]
      %v1003 = vld [vmem:[#allocation3 + $0x38] sm:$0xff]
      %v1004 = vld [vmem:[#allocation3 + $0x40] sm:$0xff]
      %v1005 = vld [vmem:[#allocation3 + $0x48] sm:$0xff]
      %v1006 = vld [vmem:[#allocation3 + $0x50] sm:$0xff]
      %v1007 = vld [vmem:[#allocation3 + $0x58] sm:$0xff]
      %v1008 = vld [vmem:[#allocation3 + $0x60] sm:$0xff]
      %v1009 = vld [vmem:[#allocation3 + $0x68] sm:$0xff]
      %v1010 = vld [vmem:[#allocation3 + $0x70] sm:$0xff]
      %v1011 = vld [vmem:[#allocation3 + $0x78] sm:$0xff]
      %v1012 = vsub.f32 %v774, %v900
      %v1013 = vsub.f32 %v776, %v902
      %v1014 = vsub.f32 %v778, %v904
      %v1015 = vsub.f32 %v780, %v906
      %v1016 = vsub.f32 %v782, %v908
      %v1017 = vsub.f32 %v784, %v910
      %v1018 = vsub.f32 %v786, %v912
      %v1019 = vsub.f32 %v788, %v914
      %v1020 = vsub.f32 %v790, %v916
      %v1021 = vsub.f32 %v792, %v918
      %v1022 = vsub.f32 %v794, %v920
      %v1023 = vsub.f32 %v796, %v922
      %v1024 = vsub.f32 %v798, %v924
      %v1025 = vsub.f32 %v800, %v926
      %v1026 = vsub.f32 %v802, %v928
      %v1027 = vsub.f32 %v804, %v930
      %v1028 = vadd.f32 %v996, %v1012
      %v1029 = vadd.f32 %v997, %v1013
      %v1030 = vadd.f32 %v998, %v1014
      %v1031 = vadd.f32 %v999, %v1015
      %v1032 = vadd.f32 %v1000, %v1016
      %v1033 = vadd.f32 %v1001, %v1017
      %v1034 = vadd.f32 %v1002, %v1018
      %v1035 = vadd.f32 %v1003, %v1019
      %v1036 = vadd.f32 %v1004, %v1020
      %v1037 = vadd.f32 %v1005, %v1021
      %v1038 = vadd.f32 %v1006, %v1022
      %v1039 = vadd.f32 %v1007, %v1023
      %v1040 = vadd.f32 %v1008, %v1024
      %v1041 = vadd.f32 %v1009, %v1025
      %v1042 = vadd.f32 %v1010, %v1026
      %v1043 = vadd.f32 %v1011, %v1027
      %1044 = vst.msk [vmem:[#allocation3] sm:$0xff] %vm979, %v1028
      %1045 = vst.msk [vmem:[#allocation3 + $0x8] sm:$0xff] %vm979, %v1029
      %1046 = vst.msk [vmem:[#allocation3 + $0x10] sm:$0xff] %vm979, %v1030
      %1047 = vst.msk [vmem:[#allocation3 + $0x18] sm:$0xff] %vm979, %v1031
      %1048 = vst.msk [vmem:[#allocation3 + $0x20] sm:$0xff] %vm979, %v1032
      %1049 = vst.msk [vmem:[#allocation3 + $0x28] sm:$0xff] %vm979, %v1033
      %1050 = vst.msk [vmem:[#allocation3 + $0x30] sm:$0xff] %vm979, %v1034
      %1051 = vst.msk [vmem:[#allocation3 + $0x38] sm:$0xff] %vm979, %v1035
      %1052 = vst.msk [vmem:[#allocation3 + $0x40] sm:$0xff] %vm979, %v1036
      %1053 = vst.msk [vmem:[#allocation3 + $0x48] sm:$0xff] %vm979, %v1037
      %1054 = vst.msk [vmem:[#allocation3 + $0x50] sm:$0xff] %vm979, %v1038
      %1055 = vst.msk [vmem:[#allocation3 + $0x58] sm:$0xff] %vm979, %v1039
      %1056 = vst.msk [vmem:[#allocation3 + $0x60] sm:$0xff] %vm979, %v1040
      %1057 = vst.msk [vmem:[#allocation3 + $0x68] sm:$0xff] %vm979, %v1041
      %1058 = vst.msk [vmem:[#allocation3 + $0x70] sm:$0xff] %vm979, %v1042
      %1059 = vst.msk [vmem:[#allocation3 + $0x78] sm:$0xff] %vm979, %v1043
    $region33: #{tpu_custom_call.1} parent=1 // pred_fallthru
      _
    %p1060 = pneg %p811
    // Predicated region
    $region34: #{tpu_custom_call.1} parent=1 // pred_check
      _
    $region35: #{tpu_custom_call.1} parent=1 // pred_check_branch
      %1062 = sbr.rel (%p811) target = $region37
    $region36: #{tpu_custom_call.1} parent=1 // pred_region
      %v1063 = vld [vmem:[#allocation2] sm:$0xff]
      %v1064 = vld [vmem:[#allocation2 + $0x8] sm:$0xff]
      %v1065 = vld [vmem:[#allocation2 + $0x10] sm:$0xff]
      %v1066 = vld [vmem:[#allocation2 + $0x18] sm:$0xff]
      %v1067 = vld [vmem:[#allocation2 + $0x20] sm:$0xff]
      %v1068 = vld [vmem:[#allocation2 + $0x28] sm:$0xff]
      %v1069 = vld [vmem:[#allocation2 + $0x30] sm:$0xff]
      %v1070 = vld [vmem:[#allocation2 + $0x38] sm:$0xff]
      %v1071 = vld [vmem:[#allocation2 + $0x40] sm:$0xff]
      %v1072 = vld [vmem:[#allocation2 + $0x48] sm:$0xff]
      %v1073 = vld [vmem:[#allocation2 + $0x50] sm:$0xff]
      %v1074 = vld [vmem:[#allocation2 + $0x58] sm:$0xff]
      %v1075 = vld [vmem:[#allocation2 + $0x60] sm:$0xff]
      %v1076 = vld [vmem:[#allocation2 + $0x68] sm:$0xff]
      %v1077 = vld [vmem:[#allocation2 + $0x70] sm:$0xff]
      %v1078 = vld [vmem:[#allocation2 + $0x78] sm:$0xff]
      %v1079 = vadd.f32 %v1063, %v710
      %v1080 = vadd.f32 %v1064, %v712
      %v1081 = vadd.f32 %v1065, %v714
      %v1082 = vadd.f32 %v1066, %v716
      %v1083 = vadd.f32 %v1067, %v718
      %v1084 = vadd.f32 %v1068, %v720
      %v1085 = vadd.f32 %v1069, %v722
      %v1086 = vadd.f32 %v1070, %v724
      %v1087 = vadd.f32 %v1071, %v726
      %v1088 = vadd.f32 %v1072, %v728
      %v1089 = vadd.f32 %v1073, %v730
      %v1090 = vadd.f32 %v1074, %v732
      %v1091 = vadd.f32 %v1075, %v734
      %v1092 = vadd.f32 %v1076, %v736
      %v1093 = vadd.f32 %v1077, %v738
      %v1094 = vadd.f32 %v1078, %v740
      %vm1095 = vcmask 7168
      %1096 = vst.msk [vmem:[#allocation2] sm:$0xff] %vm1095, %v1079
      %1097 = vst.msk [vmem:[#allocation2 + $0x8] sm:$0xff] %vm1095, %v1080
      %1098 = vst.msk [vmem:[#allocation2 + $0x10] sm:$0xff] %vm1095, %v1081
      %1099 = vst.msk [vmem:[#allocation2 + $0x18] sm:$0xff] %vm1095, %v1082
      %1100 = vst.msk [vmem:[#allocation2 + $0x20] sm:$0xff] %vm1095, %v1083
      %1101 = vst.msk [vmem:[#allocation2 + $0x28] sm:$0xff] %vm1095, %v1084
      %1102 = vst.msk [vmem:[#allocation2 + $0x30] sm:$0xff] %vm1095, %v1085
      %1103 = vst.msk [vmem:[#allocation2 + $0x38] sm:$0xff] %vm1095, %v1086
      %1104 = vst.msk [vmem:[#allocation2 + $0x40] sm:$0xff] %vm1095, %v1087
      %1105 = vst.msk [vmem:[#allocation2 + $0x48] sm:$0xff] %vm1095, %v1088
      %1106 = vst.msk [vmem:[#allocation2 + $0x50] sm:$0xff] %vm1095, %v1089
      %1107 = vst.msk [vmem:[#allocation2 + $0x58] sm:$0xff] %vm1095, %v1090
      %1108 = vst.msk [vmem:[#allocation2 + $0x60] sm:$0xff] %vm1095, %v1091
      %1109 = vst.msk [vmem:[#allocation2 + $0x68] sm:$0xff] %vm1095, %v1092
      %1110 = vst.msk [vmem:[#allocation2 + $0x70] sm:$0xff] %vm1095, %v1093
      %1111 = vst.msk [vmem:[#allocation2 + $0x78] sm:$0xff] %vm1095, %v1094
      %v1112 = vld [vmem:[#allocation3] sm:$0xff]
      %v1113 = vld [vmem:[#allocation3 + $0x8] sm:$0xff]
      %v1114 = vld [vmem:[#allocation3 + $0x10] sm:$0xff]
      %v1115 = vld [vmem:[#allocation3 + $0x18] sm:$0xff]
      %v1116 = vld [vmem:[#allocation3 + $0x20] sm:$0xff]
      %v1117 = vld [vmem:[#allocation3 + $0x28] sm:$0xff]
      %v1118 = vld [vmem:[#allocation3 + $0x30] sm:$0xff]
      %v1119 = vld [vmem:[#allocation3 + $0x38] sm:$0xff]
      %v1120 = vld [vmem:[#allocation3 + $0x40] sm:$0xff]
      %v1121 = vld [vmem:[#allocation3 + $0x48] sm:$0xff]
      %v1122 = vld [vmem:[#allocation3 + $0x50] sm:$0xff]
      %v1123 = vld [vmem:[#allocation3 + $0x58] sm:$0xff]
      %v1124 = vld [vmem:[#allocation3 + $0x60] sm:$0xff]
      %v1125 = vld [vmem:[#allocation3 + $0x68] sm:$0xff]
      %v1126 = vld [vmem:[#allocation3 + $0x70] sm:$0xff]
      %v1127 = vld [vmem:[#allocation3 + $0x78] sm:$0xff]
      %v1128 = vadd.f32 %v1112, %v774
      %v1129 = vadd.f32 %v1113, %v776
      %v1130 = vadd.f32 %v1114, %v778
      %v1131 = vadd.f32 %v1115, %v780
      %v1132 = vadd.f32 %v1116, %v782
      %v1133 = vadd.f32 %v1117, %v784
      %v1134 = vadd.f32 %v1118, %v786
      %v1135 = vadd.f32 %v1119, %v788
      %v1136 = vadd.f32 %v1120, %v790
      %v1137 = vadd.f32 %v1121, %v792
      %v1138 = vadd.f32 %v1122, %v794
      %v1139 = vadd.f32 %v1123, %v796
      %v1140 = vadd.f32 %v1124, %v798
      %v1141 = vadd.f32 %v1125, %v800
      %v1142 = vadd.f32 %v1126, %v802
      %v1143 = vadd.f32 %v1127, %v804
      %1144 = vst.msk [vmem:[#allocation3] sm:$0xff] %vm1095, %v1128
      %1145 = vst.msk [vmem:[#allocation3 + $0x8] sm:$0xff] %vm1095, %v1129
      %1146 = vst.msk [vmem:[#allocation3 + $0x10] sm:$0xff] %vm1095, %v1130
      %1147 = vst.msk [vmem:[#allocation3 + $0x18] sm:$0xff] %vm1095, %v1131
      %1148 = vst.msk [vmem:[#allocation3 + $0x20] sm:$0xff] %vm1095, %v1132
      %1149 = vst.msk [vmem:[#allocation3 + $0x28] sm:$0xff] %vm1095, %v1133
      %1150 = vst.msk [vmem:[#allocation3 + $0x30] sm:$0xff] %vm1095, %v1134
      %1151 = vst.msk [vmem:[#allocation3 + $0x38] sm:$0xff] %vm1095, %v1135
      %1152 = vst.msk [vmem:[#allocation3 + $0x40] sm:$0xff] %vm1095, %v1136
      %1153 = vst.msk [vmem:[#allocation3 + $0x48] sm:$0xff] %vm1095, %v1137
      %1154 = vst.msk [vmem:[#allocation3 + $0x50] sm:$0xff] %vm1095, %v1138
      %1155 = vst.msk [vmem:[#allocation3 + $0x58] sm:$0xff] %vm1095, %v1139
      %1156 = vst.msk [vmem:[#allocation3 + $0x60] sm:$0xff] %vm1095, %v1140
      %1157 = vst.msk [vmem:[#allocation3 + $0x68] sm:$0xff] %vm1095, %v1141
      %1158 = vst.msk [vmem:[#allocation3 + $0x70] sm:$0xff] %vm1095, %v1142
      %1159 = vst.msk [vmem:[#allocation3 + $0x78] sm:$0xff] %vm1095, %v1143
    $region37: #{tpu_custom_call.1} parent=1 // pred_fallthru
      _
    // Predicated region
    $region38: #{tpu_custom_call.1} parent=1 // pred_check
      %p1160 = pneg %p27
    $region39: #{tpu_custom_call.1} parent=1 // pred_check_branch
      %1162 = sbr.rel (%p1160) target = $region41
    $region40: #{tpu_custom_call.1} parent=1 // pred_region
      %v1163 = vld [vmem:[#allocation2] sm:$0xff]
      %v1164 = vld [vmem:[#allocation2 + $0x8] sm:$0xff]
      %v1165 = vld [vmem:[#allocation2 + $0x10] sm:$0xff]
      %v1166 = vld [vmem:[#allocation2 + $0x18] sm:$0xff]
      %v1167 = vld [vmem:[#allocation2 + $0x20] sm:$0xff]
      %v1168 = vld [vmem:[#allocation2 + $0x28] sm:$0xff]
      %v1169 = vld [vmem:[#allocation2 + $0x30] sm:$0xff]
      %v1170 = vld [vmem:[#allocation2 + $0x38] sm:$0xff]
      %v1171 = vld [vmem:[#allocation2 + $0x40] sm:$0xff]
      %v1172 = vld [vmem:[#allocation2 + $0x48] sm:$0xff]
      %v1173 = vld [vmem:[#allocation2 + $0x50] sm:$0xff]
      %v1174 = vld [vmem:[#allocation2 + $0x58] sm:$0xff]
      %v1175 = vld [vmem:[#allocation2 + $0x60] sm:$0xff]
      %v1176 = vld [vmem:[#allocation2 + $0x68] sm:$0xff]
      %v1177 = vld [vmem:[#allocation2 + $0x70] sm:$0xff]
      %v1178 = vld [vmem:[#allocation2 + $0x78] sm:$0xff]
      %vm1179 = vcmask 7168
      %1180 = vst.msk [vmem:[%s7] sm:$0xff] %vm1179, %v1163
      %1181 = vst.msk [vmem:[%s7 + $0x8] sm:$0xff] %vm1179, %v1164
      %1182 = vst.msk [vmem:[%s7 + $0x10] sm:$0xff] %vm1179, %v1165
      %1183 = vst.msk [vmem:[%s7 + $0x18] sm:$0xff] %vm1179, %v1166
      %1184 = vst.msk [vmem:[%s7 + $0x20] sm:$0xff] %vm1179, %v1167
      %1185 = vst.msk [vmem:[%s7 + $0x28] sm:$0xff] %vm1179, %v1168
      %1186 = vst.msk [vmem:[%s7 + $0x30] sm:$0xff] %vm1179, %v1169
      %1187 = vst.msk [vmem:[%s7 + $0x38] sm:$0xff] %vm1179, %v1170
      %1188 = vst.msk [vmem:[%s7 + $0x40] sm:$0xff] %vm1179, %v1171
      %1189 = vst.msk [vmem:[%s7 + $0x48] sm:$0xff] %vm1179, %v1172
      %1190 = vst.msk [vmem:[%s7 + $0x50] sm:$0xff] %vm1179, %v1173
      %1191 = vst.msk [vmem:[%s7 + $0x58] sm:$0xff] %vm1179, %v1174
      %1192 = vst.msk [vmem:[%s7 + $0x60] sm:$0xff] %vm1179, %v1175
      %1193 = vst.msk [vmem:[%s7 + $0x68] sm:$0xff] %vm1179, %v1176
      %1194 = vst.msk [vmem:[%s7 + $0x70] sm:$0xff] %vm1179, %v1177
      %1195 = vst.msk [vmem:[%s7 + $0x78] sm:$0xff] %vm1179, %v1178
      %v1196 = vld [vmem:[#allocation3] sm:$0xff]
      %v1197 = vld [vmem:[#allocation3 + $0x8] sm:$0xff]
      %v1198 = vld [vmem:[#allocation3 + $0x10] sm:$0xff]
      %v1199 = vld [vmem:[#allocation3 + $0x18] sm:$0xff]
      %v1200 = vld [vmem:[#allocation3 + $0x20] sm:$0xff]
      %v1201 = vld [vmem:[#allocation3 + $0x28] sm:$0xff]
      %v1202 = vld [vmem:[#allocation3 + $0x30] sm:$0xff]
      %v1203 = vld [vmem:[#allocation3 + $0x38] sm:$0xff]
      %v1204 = vld [vmem:[#allocation3 + $0x40] sm:$0xff]
      %v1205 = vld [vmem:[#allocation3 + $0x48] sm:$0xff]
      %v1206 = vld [vmem:[#allocation3 + $0x50] sm:$0xff]
      %v1207 = vld [vmem:[#allocation3 + $0x58] sm:$0xff]
      %v1208 = vld [vmem:[#allocation3 + $0x60] sm:$0xff]
      %v1209 = vld [vmem:[#allocation3 + $0x68] sm:$0xff]
      %v1210 = vld [vmem:[#allocation3 + $0x70] sm:$0xff]
      %v1211 = vld [vmem:[#allocation3 + $0x78] sm:$0xff]
      %1212 = vst.msk [vmem:[%s8] sm:$0xff] %vm1179, %v1196
      %1213 = vst.msk [vmem:[%s8 + $0x8] sm:$0xff] %vm1179, %v1197
      %1214 = vst.msk [vmem:[%s8 + $0x10] sm:$0xff] %vm1179, %v1198
      %1215 = vst.msk [vmem:[%s8 + $0x18] sm:$0xff] %vm1179, %v1199
      %1216 = vst.msk [vmem:[%s8 + $0x20] sm:$0xff] %vm1179, %v1200
      %1217 = vst.msk [vmem:[%s8 + $0x28] sm:$0xff] %vm1179, %v1201
      %1218 = vst.msk [vmem:[%s8 + $0x30] sm:$0xff] %vm1179, %v1202
      %1219 = vst.msk [vmem:[%s8 + $0x38] sm:$0xff] %vm1179, %v1203
      %1220 = vst.msk [vmem:[%s8 + $0x40] sm:$0xff] %vm1179, %v1204
      %1221 = vst.msk [vmem:[%s8 + $0x48] sm:$0xff] %vm1179, %v1205
      %1222 = vst.msk [vmem:[%s8 + $0x50] sm:$0xff] %vm1179, %v1206
      %1223 = vst.msk [vmem:[%s8 + $0x58] sm:$0xff] %vm1179, %v1207
      %1224 = vst.msk [vmem:[%s8 + $0x60] sm:$0xff] %vm1179, %v1208
      %1225 = vst.msk [vmem:[%s8 + $0x68] sm:$0xff] %vm1179, %v1209
      %1226 = vst.msk [vmem:[%s8 + $0x70] sm:$0xff] %vm1179, %v1210
      %1227 = vst.msk [vmem:[%s8 + $0x78] sm:$0xff] %vm1179, %v1211
    $region41: #{tpu_custom_call.1} parent=1 // pred_fallthru
      _
    // Predicated region
    $region42: #{tpu_custom_call.1} parent=1 // pred_check
      _
    $region43: #{tpu_custom_call.1} parent=1 // pred_check_branch
      %1229 = sbr.rel (0) target = $region45
    $region44: #{tpu_custom_call.1} parent=1 // pred_region
      %s1231 = ssub.s32 2048, 2048
      %1232 = vsyncadd [#allocation5], %s1231
      %s1233 = sshll.u32 [#allocation4], 4
      %s1234 = int_to_ptr.vmem [resolvable:$true] %s1233
      %1239 = dma.vmem_to_hbm [thread:$0]  %s1234, 2048, %s6, [#allocation5], 128, 128, 8
    $region45: #{tpu_custom_call.1} parent=1 // pred_fallthru
      _
    // Predicated region
    $region46: #{tpu_custom_call.1} parent=1 // pred_check
      _
    $region47: #{tpu_custom_call.1} parent=1 // pred_check_branch
      %1241 = sbr.rel (0) target = $region49
    $region48: #{tpu_custom_call.1} parent=1 // pred_region
      _
    $region49: #{tpu_custom_call.1} parent=1 // pred_fallthru
      _
    // Predicated region
    $region50: #{tpu_custom_call.1} parent=1 // pred_check
      _
    $region51: #{tpu_custom_call.1} parent=1 // pred_check_branch
      %1243 = sbr.rel (0) target = $region53
    $region52: #{tpu_custom_call.1} parent=1 // pred_region
      _
    $region53: #{tpu_custom_call.1} parent=1 // pred_fallthru
      _
    // Predicated region
    $region54: #{tpu_custom_call.1} parent=1 // pred_check
      _
    $region55: #{tpu_custom_call.1} parent=1 // pred_check_branch
      %1245 = sbr.rel (0) target = $region57
    $region56: #{tpu_custom_call.1} parent=1 // pred_region
      %1246 = dma.done [#allocation5], 2048
    $region57: #{tpu_custom_call.1} parent=1 // pred_fallthru
      _
    // Predicated region
    $region58: #{tpu_custom_call.1} parent=1 // pred_check
      _
    $region59: #{tpu_custom_call.1} parent=1 // pred_check_branch
      %1248 = sbr.rel (0) target = $region61
    $region60: #{tpu_custom_call.1} parent=1 // pred_region
      _
    $region61: #{tpu_custom_call.1} parent=1 // pred_fallthru
      _
    // Predicated region
    $region62: #{tpu_custom_call.1} parent=1 // pred_check
      _
    $region63: #{tpu_custom_call.1} parent=1 // pred_check_branch
      %1250 = sbr.rel (0) target = $region65
    $region64: #{tpu_custom_call.1} parent=1 // pred_region
      _
    $region65: #{tpu_custom_call.1} parent=1 // pred_fallthru
      _
    %1251 = vsyncpa [#allocation5], 1

</llo_original>
